<compile_context>
chip_gen: v6e
topology: v6e:2x2x1
jax: 0.10.0
libtpu: 0.0.40
codegen_flags: <defaults>
</compile_context>

<pallas_src>
import functools
import math

import jax
import jax.numpy as jnp
from jax import lax
from jax.experimental import pallas as pl
from jax.experimental.pallas import tpu as pltpu

LN_EPS = 1e-5                      # torch.nn.LayerNorm default
INV_SQRT2 = 0.7071067811865476
SQRT_2_OVER_PI = 0.7978845608028654


def _round_up(x, m):
    return ((x + m - 1) // m) * m


def _mlp_block_kernel(x_ref, g_ref, b_ref, w1_ref, b1_ref, w2_ref, b2_ref,
                      o_ref, *, gelu_approximate=False):
    # x_ref: (tm, D) tile of rows; LayerNorm / accumulation in f32.
    x = x_ref[...].astype(jnp.float32)

    # ---- LayerNorm over last dim (single-pass statistics) ----
    mean = jnp.mean(x, axis=-1, keepdims=True)
    mean_sq = jnp.mean(x * x, axis=-1, keepdims=True)
    var = jnp.maximum(mean_sq - mean * mean, 0.0)
    inv = lax.rsqrt(var + LN_EPS)
    # g_ref / b_ref are already f32 (pre-cast in the wrapper).
    xn = (x - mean) * inv * g_ref[...] + b_ref[...]

    # ---- Linear1 (MXU, weight-native dtype operands, f32 accumulate) ----
    h = jnp.dot(xn.astype(w1_ref.dtype), w1_ref[...],
                preferred_element_type=jnp.float32)
    h = h + b1_ref[...]

    # ---- GELU ----
    if gelu_approximate:
        # tanh approximation: transcendental goes to the EUP slot.
        h = 0.5 * h * (1.0 + jnp.tanh(
            jnp.float32(SQRT_2_OVER_PI) * (h + 0.044715 * h * h * h)))
    else:
        # torch.nn.GELU() default = exact erf formulation.
        h = 0.5 * h * (1.0 + lax.erf(h * jnp.float32(INV_SQRT2)))

    # TODO(synk): Dropout omitted (inference / eval semantics -> identity).

    # ---- Linear2 ----
    y = jnp.dot(h.astype(w2_ref.dtype), w2_ref[...],
                preferred_element_type=jnp.float32)
    y = y + b2_ref[...]

    o_ref[...] = y.astype(o_ref.dtype)


@functools.partial(
    jax.jit,
    static_argnames=("tm_max", "vmem_limit_bytes", "bf16_matmul",
                     "gelu_approximate"))
def _mlp_block_impl(x, ln_gamma, ln_beta, w1, b1, w2, b2, *, tm_max,
                    vmem_limit_bytes, bf16_matmul, gelu_approximate):
    B, S, D = x.shape
    H = w1.shape[1]
    N = B * S

    # Balanced row tiles: at least 2 tiles (keeps both v7x TCs busy via the
    # "parallel" grid axis), each a multiple of 8 sublanes, <= tm_max, and
    # sized to minimize pad-row waste (e.g. N=394 -> 2 x 200, not 2 x 256).
    n_tiles = max(pl.cdiv(N, tm_max), 2 if N >= 16 else 1)
    tm = _round_up(pl.cdiv(N, n_tiles), 8)
    n_pad = n_tiles * tm

    x2 = x.reshape(N, D)
    if n_pad != N:
        # Zero-pad rows; LN on all-zero rows is finite (var=0 + eps) and the
        # pad rows are sliced off after the call.
        x2 = jnp.pad(x2, ((0, n_pad - N), (0, 0)))

    # Small vectors: pre-cast to f32 so the kernel body does no per-step cast.
    g2 = ln_gamma.reshape(1, D).astype(jnp.float32)
    be2 = ln_beta.reshape(1, D).astype(jnp.float32)
    b1_2 = b1.reshape(1, H).astype(jnp.float32)
    b2_2 = b2.reshape(1, D).astype(jnp.float32)

    # Weights: one-time cast to bf16 for the native MXU path (halves resident
    # VMEM + weight DMA); f32 accumulation is kept inside the kernel.
    if bf16_matmul:
        w1c = w1.astype(jnp.bfloat16)
        w2c = w2.astype(jnp.bfloat16)
    else:
        w1c = w1
        w2c = w2

    kernel = functools.partial(_mlp_block_kernel,
                               gelu_approximate=gelu_approximate)

    # Grid-invariant operands: constant index map + single buffer.
    def resident(shape):
        return pl.BlockSpec(shape, lambda i: (0, 0),
                            pipeline_mode=pl.Buffered(1))

    out = pl.pallas_call(
        kernel,
        out_shape=jax.ShapeDtypeStruct((n_pad, D), x.dtype),
        grid_spec=pltpu.PrefetchScalarGridSpec(
            num_scalar_prefetch=0,
            grid=(n_tiles,),
            in_specs=[
                pl.BlockSpec((tm, D), lambda i: (i, 0)),  # x rows (pipelined)
                resident((1, D)),                         # ln gamma
                resident((1, D)),                         # ln beta
                resident((D, H)),                         # w1
                resident((1, H)),                         # b1
                resident((H, D)),                         # w2
                resident((1, D)),                         # b2
            ],
            out_specs=pl.BlockSpec((tm, D), lambda i: (i, 0)),
        ),
        compiler_params=pltpu.CompilerParams(
            dimension_semantics=("parallel",),     # rows across TCs (v7x)
            vmem_limit_bytes=vmem_limit_bytes,
        ),
    )(x2, g2, be2, w1c, b1_2, w2c, b2_2)

    return out[:N].reshape(B, S, D)


def mlp_block(x, ln_gamma, ln_beta, w1, b1, w2, b2, *, bf16_matmul=True,
              gelu_approximate=False):
    """x: (B, S, D). Weights: w1 (D,H), b1 (H,), w2 (H,D), b2 (D,)."""
    # Generation-aware tile / VMEM settings. Fallback (query fails) is the
    # v7x-safe choice, which is also valid on v5e/v6e.
    try:
        vmem_cap = pltpu.get_tpu_info().vmem_capacity_bytes
    except Exception:
        vmem_cap = 64 * 1024 * 1024
    if vmem_cap <= 64 * 1024 * 1024:          # v7x: 64 MiB per TensorCore
        tm_max = 256
        vmem_limit = 56 * 1024 * 1024
    else:                                     # v5e / v6e: 128 MiB physical
        tm_max = 512
        vmem_limit = 100 * 1024 * 1024

    return _mlp_block_impl(x, ln_gamma, ln_beta, w1, b1, w2, b2,
                           tm_max=tm_max, vmem_limit_bytes=vmem_limit,
                           bf16_matmul=bf16_matmul,
                           gelu_approximate=gelu_approximate)


def _reference(x, ln_gamma, ln_beta, w1, b1, w2, b2):
    xf = x.astype(jnp.float32)
    mean = jnp.mean(xf, axis=-1, keepdims=True)
    var = jnp.mean((xf - mean) ** 2, axis=-1, keepdims=True)
    xn = (xf - mean) * lax.rsqrt(var + LN_EPS) * ln_gamma + ln_beta
    h = xn @ w1.astype(jnp.float32) + b1
    h = 0.5 * h * (1.0 + lax.erf(h * jnp.float32(INV_SQRT2)))
    y = h @ w2.astype(jnp.float32) + b2
    return y.astype(x.dtype)


if __name__ == "__main__":
    # Small ViT-like shapes: 197 tokens (196 patches + cls) exercises the
    # balanced-pad path (394 rows -> 2 x 200-row tiles); D is a multiple of
    # 128 so stores are lane-dense.
    B, S, D, H = 2, 197, 128, 512  # embedding_dim=128, mlp_size=512

    key = jax.random.PRNGKey(0)
    kx, kw1, kb1, kw2, kb2 = jax.random.split(key, 5)

    x = jax.random.normal(kx, (B, S, D), dtype=jnp.float32)

    # Deterministic parameter init (uniform like torch Linear's default scale).
    ln_gamma = jnp.ones((D,), jnp.float32)
    ln_beta = jnp.zeros((D,), jnp.float32)
    lim1 = 1.0 / math.sqrt(D)
    w1 = jax.random.uniform(kw1, (D, H), jnp.float32, -lim1, lim1)
    b1 = jax.random.uniform(kb1, (H,), jnp.float32, -lim1, lim1)
    lim2 = 1.0 / math.sqrt(H)
    w2 = jax.random.uniform(kw2, (H, D), jnp.float32, -lim2, lim2)
    b2 = jax.random.uniform(kb2, (D,), jnp.float32, -lim2, lim2)

    y_ref = _reference(x, ln_gamma, ln_beta, w1, b1, w2, b2)

    # Fast path: bf16 MXU operands, f32 accumulate (relaxed tolerance).
    y_bf16 = mlp_block(x, ln_gamma, ln_beta, w1, b1, w2, b2, bf16_matmul=True)
    jax.block_until_ready(y_bf16)
    assert y_bf16.shape == (B, S, D)
    assert jnp.allclose(y_bf16, y_ref, atol=5e-2, rtol=5e-2), \
        "bf16-matmul kernel mismatch vs reference"

    # Exactness check: full f32 path against the f32 reference.
    y_f32 = mlp_block(x, ln_gamma, ln_beta, w1, b1, w2, b2, bf16_matmul=False)
    jax.block_until_ready(y_f32)
    assert jnp.allclose(y_f32, y_ref, atol=1e-4, rtol=1e-4), \
        "f32 kernel mismatch vs reference"

    print("KERNEL_OK")
</pallas_src>

<mosaic_0001>
module attributes {stable_mosaic.version = 11 : i64} {
  func.func @_mlp_block_kernel(%arg0: i32, %arg1: memref<200x128xf32, #tpu.memory_space<vmem>>, %arg2: memref<1x128xf32, #tpu.memory_space<vmem>>, %arg3: memref<1x128xf32, #tpu.memory_space<vmem>>, %arg4: memref<128x512xbf16, #tpu.memory_space<vmem>>, %arg5: memref<1x512xf32, #tpu.memory_space<vmem>>, %arg6: memref<512x128xbf16, #tpu.memory_space<vmem>>, %arg7: memref<1x128xf32, #tpu.memory_space<vmem>>, %arg8: memref<200x128xf32, #tpu.memory_space<vmem>>) attributes {dimension_semantics = [#tpu.dimension_semantics<parallel>], iteration_bounds = array<i64: 2>, scalar_prefetch = 0 : i64, scratch_operands = 0 : i64, tpu.core_type = #tpu.core_type<tc>, window_params = [{transform_indices = @transform_0, window_bounds = array<i64: 200, 128>}, {pipeline_mode = #tpu.pipeline_mode<synchronous>, transform_indices = @transform_1, window_bounds = array<i64: 1, 128>}, {pipeline_mode = #tpu.pipeline_mode<synchronous>, transform_indices = @transform_2, window_bounds = array<i64: 1, 128>}, {pipeline_mode = #tpu.pipeline_mode<synchronous>, transform_indices = @transform_3, window_bounds = array<i64: 128, 512>}, {pipeline_mode = #tpu.pipeline_mode<synchronous>, transform_indices = @transform_4, window_bounds = array<i64: 1, 512>}, {pipeline_mode = #tpu.pipeline_mode<synchronous>, transform_indices = @transform_5, window_bounds = array<i64: 512, 128>}, {pipeline_mode = #tpu.pipeline_mode<synchronous>, transform_indices = @transform_6, window_bounds = array<i64: 1, 128>}, {transform_indices = @transform_7, window_bounds = array<i64: 200, 128>}]} {
    %c0 = arith.constant 0 : index
    %c0_0 = arith.constant 0 : index
    %0 = vector.load %arg1[%c0, %c0_0] : memref<200x128xf32, #tpu.memory_space<vmem>>, vector<200x128xf32>
    %cst = arith.constant dense<0.000000e+00> : vector<200xf32>
    %1 = vector.multi_reduction <add>, %0, %cst [1] : vector<200x128xf32> to vector<200xf32>
    %2 = vector.shape_cast %1 : vector<200xf32> to vector<200x1xf32>
    %cst_1 = arith.constant 1.280000e+02 : f32
    %3 = vector.broadcast %cst_1 : f32 to vector<200x1xf32>
    %4 = arith.divf %2, %3 : vector<200x1xf32>
    %5 = arith.mulf %0, %0 : vector<200x128xf32>
    %cst_2 = arith.constant dense<0.000000e+00> : vector<200xf32>
    %6 = vector.multi_reduction <add>, %5, %cst_2 [1] : vector<200x128xf32> to vector<200xf32>
    %7 = vector.shape_cast %6 : vector<200xf32> to vector<200x1xf32>
    %cst_3 = arith.constant 1.280000e+02 : f32
    %8 = vector.broadcast %cst_3 : f32 to vector<200x1xf32>
    %9 = arith.divf %7, %8 : vector<200x1xf32>
    %10 = arith.mulf %4, %4 : vector<200x1xf32>
    %11 = arith.subf %9, %10 : vector<200x1xf32>
    %cst_4 = arith.constant 0.000000e+00 : f32
    %12 = vector.broadcast %cst_4 : f32 to vector<200x1xf32>
    %13 = arith.maximumf %11, %12 : vector<200x1xf32>
    %cst_5 = arith.constant 9.99999974E-6 : f32
    %14 = vector.broadcast %cst_5 : f32 to vector<200x1xf32>
    %15 = arith.addf %13, %14 : vector<200x1xf32>
    %16 = math.rsqrt %15 : vector<200x1xf32>
    %17 = vector.broadcast %4 : vector<200x1xf32> to vector<200x128xf32>
    %18 = arith.subf %0, %17 : vector<200x128xf32>
    %19 = vector.broadcast %16 : vector<200x1xf32> to vector<200x128xf32>
    %20 = arith.mulf %18, %19 : vector<200x128xf32>
    %c0_6 = arith.constant 0 : index
    %c0_7 = arith.constant 0 : index
    %21 = vector.load %arg2[%c0_6, %c0_7] : memref<1x128xf32, #tpu.memory_space<vmem>>, vector<1x128xf32>
    %22 = vector.broadcast %21 : vector<1x128xf32> to vector<200x128xf32>
    %23 = arith.mulf %20, %22 : vector<200x128xf32>
    %c0_8 = arith.constant 0 : index
    %c0_9 = arith.constant 0 : index
    %24 = vector.load %arg3[%c0_8, %c0_9] : memref<1x128xf32, #tpu.memory_space<vmem>>, vector<1x128xf32>
    %25 = vector.broadcast %24 : vector<1x128xf32> to vector<200x128xf32>
    %26 = arith.addf %23, %25 : vector<200x128xf32>
    %27 = arith.truncf %26 : vector<200x128xf32> to vector<200x128xbf16>
    %c0_10 = arith.constant 0 : index
    %c0_11 = arith.constant 0 : index
    %28 = vector.load %arg4[%c0_10, %c0_11] : memref<128x512xbf16, #tpu.memory_space<vmem>>, vector<128x512xbf16>
    %cst_12 = arith.constant dense<0.000000e+00> : vector<200x512xf32>
    %29 = tpu.matmul %27, %28, %cst_12 {dimension_numbers = #tpu.dot_dimension_numbers<[1], [0], [0], [1], [0, 0, 1, 1], [], []>} : vector<200x128xbf16>, vector<128x512xbf16>, vector<200x512xf32> -> vector<200x512xf32>
    %c0_13 = arith.constant 0 : index
    %c0_14 = arith.constant 0 : index
    %30 = vector.load %arg5[%c0_13, %c0_14] : memref<1x512xf32, #tpu.memory_space<vmem>>, vector<1x512xf32>
    %31 = vector.broadcast %30 : vector<1x512xf32> to vector<200x512xf32>
    %32 = arith.addf %29, %31 : vector<200x512xf32>
    %cst_15 = arith.constant 5.000000e-01 : f32
    %33 = vector.broadcast %cst_15 : f32 to vector<200x512xf32>
    %34 = arith.mulf %33, %32 : vector<200x512xf32>
    %cst_16 = arith.constant 0.707106769 : f32
    %35 = vector.broadcast %cst_16 : f32 to vector<200x512xf32>
    %36 = arith.mulf %32, %35 : vector<200x512xf32>
    %37 = math.erf %36 : vector<200x512xf32>
    %cst_17 = arith.constant 1.000000e+00 : f32
    %38 = vector.broadcast %cst_17 : f32 to vector<200x512xf32>
    %39 = arith.addf %38, %37 : vector<200x512xf32>
    %40 = arith.mulf %34, %39 : vector<200x512xf32>
    %41 = arith.truncf %40 : vector<200x512xf32> to vector<200x512xbf16>
    %c0_18 = arith.constant 0 : index
    %c0_19 = arith.constant 0 : index
    %42 = vector.load %arg6[%c0_18, %c0_19] : memref<512x128xbf16, #tpu.memory_space<vmem>>, vector<512x128xbf16>
    %cst_20 = arith.constant dense<0.000000e+00> : vector<200x128xf32>
    %43 = tpu.matmul %41, %42, %cst_20 {dimension_numbers = #tpu.dot_dimension_numbers<[1], [0], [0], [1], [0, 0, 1, 1], [], []>} : vector<200x512xbf16>, vector<512x128xbf16>, vector<200x128xf32> -> vector<200x128xf32>
    %c0_21 = arith.constant 0 : index
    %c0_22 = arith.constant 0 : index
    %44 = vector.load %arg7[%c0_21, %c0_22] : memref<1x128xf32, #tpu.memory_space<vmem>>, vector<1x128xf32>
    %45 = vector.broadcast %44 : vector<1x128xf32> to vector<200x128xf32>
    %46 = arith.addf %43, %45 : vector<200x128xf32>
    %c0_23 = arith.constant 0 : index
    %c0_24 = arith.constant 0 : index
    %47 = vector.load %arg8[%c0_23, %c0_24] : memref<200x128xf32, #tpu.memory_space<vmem>>, vector<200x128xf32>
    tpu.vector_store %arg8[%c0_23, %c0_24], %46 {strides = array<i32>} : memref<200x128xf32, #tpu.memory_space<vmem>>, vector<200x128xf32>,
    return
  }
  func.func @transform_0(%arg0: i32) -> (i32, i32) {
    %c0_i32 = arith.constant 0 : i32
    %c0_i32_0 = arith.constant 0 : i32
    return %arg0, %c0_i32 : i32, i32
  }
  func.func @transform_1(%arg0: i32) -> (i32, i32) {
    %c0_i32 = arith.constant 0 : i32
    %c0_i32_0 = arith.constant 0 : i32
    %c0_i32_1 = arith.constant 0 : i32
    return %c0_i32, %c0_i32_0 : i32, i32
  }
  func.func @transform_2(%arg0: i32) -> (i32, i32) {
    %c0_i32 = arith.constant 0 : i32
    %c0_i32_0 = arith.constant 0 : i32
    %c0_i32_1 = arith.constant 0 : i32
    return %c0_i32, %c0_i32_0 : i32, i32
  }
  func.func @transform_3(%arg0: i32) -> (i32, i32) {
    %c0_i32 = arith.constant 0 : i32
    %c0_i32_0 = arith.constant 0 : i32
    %c0_i32_1 = arith.constant 0 : i32
    return %c0_i32, %c0_i32_0 : i32, i32
  }
  func.func @transform_4(%arg0: i32) -> (i32, i32) {
    %c0_i32 = arith.constant 0 : i32
    %c0_i32_0 = arith.constant 0 : i32
    %c0_i32_1 = arith.constant 0 : i32
    return %c0_i32, %c0_i32_0 : i32, i32
  }
  func.func @transform_5(%arg0: i32) -> (i32, i32) {
    %c0_i32 = arith.constant 0 : i32
    %c0_i32_0 = arith.constant 0 : i32
    %c0_i32_1 = arith.constant 0 : i32
    return %c0_i32, %c0_i32_0 : i32, i32
  }
  func.func @transform_6(%arg0: i32) -> (i32, i32) {
    %c0_i32 = arith.constant 0 : i32
    %c0_i32_0 = arith.constant 0 : i32
    %c0_i32_1 = arith.constant 0 : i32
    return %c0_i32, %c0_i32_0 : i32, i32
  }
  func.func @transform_7(%arg0: i32) -> (i32, i32) {
    %c0_i32 = arith.constant 0 : i32
    %c0_i32_0 = arith.constant 0 : i32
    return %arg0, %c0_i32 : i32, i32
  }
}

</mosaic_0001>

<llo_original>
// kernel: _mlp_block_impl.1
$region0: #{_mlp_block_impl.1}
  #allocation0 [shape = 'u32[]', space=smem, size = 0x4, offset = 0x4, fixed_abs, tag = 'smem constant byte address 0x4 - core index']
  #allocation1 [shape = 'u32[144,128]{1,0:T(1,128)}', space=vmem, size = 0x12000, scoped, tag = 'internal scratch']
  %s0 = inlined_call_operand.vmem [shape: f32[400,128], index: 0, kind: input, shape index: {}]
  %s1 = inlined_call_operand.vmem [shape: f32[1,128], index: 1, kind: input, shape index: {}]
  %s2 = inlined_call_operand.vmem [shape: f32[1,128], index: 2, kind: input, shape index: {}]
  %s3 = inlined_call_operand.vmem [shape: bf16[128,512], index: 3, kind: input, shape index: {}]
  %s4 = inlined_call_operand.vmem [shape: f32[1,512], index: 4, kind: input, shape index: {}]
  %s5 = inlined_call_operand.vmem [shape: bf16[512,128], index: 5, kind: input, shape index: {}]
  %s6 = inlined_call_operand.vmem [shape: f32[1,128], index: 6, kind: input, shape index: {}]
  %s7 = inlined_call_operand.vmem [shape: f32[400,128], index: 7, kind: output, shape index: {}]
  %s8 = sld [smem:[#allocation0]]
  $region61: #{_mlp_block_impl.1} parent=0
    _
  %s10 = ssub.s32 1, %s8
  %s11 = scalar_select 0, %s10, %s8
  loop: start=0, step=1, limit=4
  $region2: #{_mlp_block_impl.1} parent=0 // loop_pre_header
    _
  $region3: #{_mlp_block_impl.1} parent=0 // loop_header
    %s13 = sphi 0, %s17
    %p14 = scmp.ge.s32.totalorder %s13, 4
    %s23 = sphi 0, %s25
    %s26 = sphi 0, %s23
    %s27 = sphi 0, %s26
    %s43 = sphi 0, %s27
    %s47 = sphi 0, %s47
    %s49 = sphi 0, %s47
    %s50 = sphi 0, %s49
    %s64 = sphi 0, %s50
    %s68 = sphi 0, %s68
    %s70 = sphi 0, %s68
    %s71 = sphi 0, %s70
    %s85 = sphi 0, %s71
    %s89 = sphi 0, %s89
    %s91 = sphi 0, %s89
    %s92 = sphi 0, %s91
    %s106 = sphi 0, %s92
    %s110 = sphi 0, %s110
    %s112 = sphi 0, %s110
    %s113 = sphi 0, %s112
    %s127 = sphi 0, %s113
    %s131 = sphi 0, %s131
    %s133 = sphi 0, %s131
    %s134 = sphi 0, %s133
    %s148 = sphi 0, %s134
    %s152 = sphi 0, %s152
    %s154 = sphi 0, %s152
    %s155 = sphi 0, %s154
    %s169 = sphi 0, %s155
    %s175 = sphi 0, %s177
    %s178 = sphi 0, %s175
    %s179 = sphi 0, %s178
    %s195 = sphi 0, %s179
  $region4: #{_mlp_block_impl.1} parent=0 // loop_header_branch
    %16 = sbr.rel (%p14) target = $region8
  $region5: #{_mlp_block_impl.1} parent=0 // loop_body
    %s18 = ssub.s32 %s13, 1
    %s19 = ssub.s32 %s13, 2
    %s20 = sadd.s32 %s13, 1
    %s21 = ssub.s32 %s13, %s20
    %p22 = scmp.eq.s32.totalorder %s21, 0
    %s24 = sadd.s32 %s23, 1
    %s25 = scalar_select %p22, %s23, %s24
    %p28 = pneg %p22
    %p29 = scmp.eq.s32.totalorder %s13, 1
    %p30 = por %p28, %p29
    %p31 = scmp.ne.s32.totalorder %s23, %s26
    %p32 = scmp.eq.s32.totalorder %s13, 0
    %p33 = por %p31, %p32
    %p34 = scmp.ne.s32.totalorder %s23, %s26
    %p35 = scmp.eq.s32.totalorder %s18, 1
    %p36 = por %p34, %p35
    %p37 = scmp.ne.s32.totalorder %s26, %s27
    %p38 = scmp.eq.s32.totalorder %s18, 0
    %p39 = por %p37, %p38
    %p40 = scmp.ne.s32.totalorder %s26, %s27
    %p41 = scmp.eq.s32.totalorder %s19, 1
    %p42 = por %p40, %p41
    %p44 = scmp.ne.s32.totalorder %s27, %s43
    %p45 = scmp.eq.s32.totalorder %s19, 0
    %p46 = por %p44, %p45
    %s48 = sadd.s32 %s47, 1
    %p51 = scmp.eq.s32.totalorder %s13, 1
    %p52 = scmp.ne.s32.totalorder %s47, %s49
    %p53 = scmp.eq.s32.totalorder %s13, 0
    %p54 = por %p52, %p53
    %p55 = scmp.ne.s32.totalorder %s47, %s49
    %p56 = scmp.eq.s32.totalorder %s18, 1
    %p57 = por %p55, %p56
    %p58 = scmp.ne.s32.totalorder %s49, %s50
    %p59 = scmp.eq.s32.totalorder %s18, 0
    %p60 = por %p58, %p59
    %p61 = scmp.ne.s32.totalorder %s49, %s50
    %p62 = scmp.eq.s32.totalorder %s19, 1
    %p63 = por %p61, %p62
    %p65 = scmp.ne.s32.totalorder %s50, %s64
    %p66 = scmp.eq.s32.totalorder %s19, 0
    %p67 = por %p65, %p66
    %s69 = sadd.s32 %s68, 1
    %p72 = scmp.eq.s32.totalorder %s13, 1
    %p73 = scmp.ne.s32.totalorder %s68, %s70
    %p74 = scmp.eq.s32.totalorder %s13, 0
    %p75 = por %p73, %p74
    %p76 = scmp.ne.s32.totalorder %s68, %s70
    %p77 = scmp.eq.s32.totalorder %s18, 1
    %p78 = por %p76, %p77
    %p79 = scmp.ne.s32.totalorder %s70, %s71
    %p80 = scmp.eq.s32.totalorder %s18, 0
    %p81 = por %p79, %p80
    %p82 = scmp.ne.s32.totalorder %s70, %s71
    %p83 = scmp.eq.s32.totalorder %s19, 1
    %p84 = por %p82, %p83
    %p86 = scmp.ne.s32.totalorder %s71, %s85
    %p87 = scmp.eq.s32.totalorder %s19, 0
    %p88 = por %p86, %p87
    %s90 = sadd.s32 %s89, 1
    %p93 = scmp.eq.s32.totalorder %s13, 1
    %p94 = scmp.ne.s32.totalorder %s89, %s91
    %p95 = scmp.eq.s32.totalorder %s13, 0
    %p96 = por %p94, %p95
    %p97 = scmp.ne.s32.totalorder %s89, %s91
    %p98 = scmp.eq.s32.totalorder %s18, 1
    %p99 = por %p97, %p98
    %p100 = scmp.ne.s32.totalorder %s91, %s92
    %p101 = scmp.eq.s32.totalorder %s18, 0
    %p102 = por %p100, %p101
    %p103 = scmp.ne.s32.totalorder %s91, %s92
    %p104 = scmp.eq.s32.totalorder %s19, 1
    %p105 = por %p103, %p104
    %p107 = scmp.ne.s32.totalorder %s92, %s106
    %p108 = scmp.eq.s32.totalorder %s19, 0
    %p109 = por %p107, %p108
    %s111 = sadd.s32 %s110, 1
    %p114 = scmp.eq.s32.totalorder %s13, 1
    %p115 = scmp.ne.s32.totalorder %s110, %s112
    %p116 = scmp.eq.s32.totalorder %s13, 0
    %p117 = por %p115, %p116
    %p118 = scmp.ne.s32.totalorder %s110, %s112
    %p119 = scmp.eq.s32.totalorder %s18, 1
    %p120 = por %p118, %p119
    %p121 = scmp.ne.s32.totalorder %s112, %s113
    %p122 = scmp.eq.s32.totalorder %s18, 0
    %p123 = por %p121, %p122
    %p124 = scmp.ne.s32.totalorder %s112, %s113
    %p125 = scmp.eq.s32.totalorder %s19, 1
    %p126 = por %p124, %p125
    %p128 = scmp.ne.s32.totalorder %s113, %s127
    %p129 = scmp.eq.s32.totalorder %s19, 0
    %p130 = por %p128, %p129
    %s132 = sadd.s32 %s131, 1
    %p135 = scmp.eq.s32.totalorder %s13, 1
    %p136 = scmp.ne.s32.totalorder %s131, %s133
    %p137 = scmp.eq.s32.totalorder %s13, 0
    %p138 = por %p136, %p137
    %p139 = scmp.ne.s32.totalorder %s131, %s133
    %p140 = scmp.eq.s32.totalorder %s18, 1
    %p141 = por %p139, %p140
    %p142 = scmp.ne.s32.totalorder %s133, %s134
    %p143 = scmp.eq.s32.totalorder %s18, 0
    %p144 = por %p142, %p143
    %p145 = scmp.ne.s32.totalorder %s133, %s134
    %p146 = scmp.eq.s32.totalorder %s19, 1
    %p147 = por %p145, %p146
    %p149 = scmp.ne.s32.totalorder %s134, %s148
    %p150 = scmp.eq.s32.totalorder %s19, 0
    %p151 = por %p149, %p150
    %s153 = sadd.s32 %s152, 1
    %p156 = scmp.eq.s32.totalorder %s13, 1
    %p157 = scmp.ne.s32.totalorder %s152, %s154
    %p158 = scmp.eq.s32.totalorder %s13, 0
    %p159 = por %p157, %p158
    %p160 = scmp.ne.s32.totalorder %s152, %s154
    %p161 = scmp.eq.s32.totalorder %s18, 1
    %p162 = por %p160, %p161
    %p163 = scmp.ne.s32.totalorder %s154, %s155
    %p164 = scmp.eq.s32.totalorder %s18, 0
    %p165 = por %p163, %p164
    %p166 = scmp.ne.s32.totalorder %s154, %s155
    %p167 = scmp.eq.s32.totalorder %s19, 1
    %p168 = por %p166, %p167
    %p170 = scmp.ne.s32.totalorder %s155, %s169
    %p171 = scmp.eq.s32.totalorder %s19, 0
    %p172 = por %p170, %p171
    %s173 = ssub.s32 %s13, %s20
    %p174 = scmp.eq.s32.totalorder %s173, 0
    %s176 = sadd.s32 %s175, 1
    %s177 = scalar_select %p174, %s175, %s176
    %p180 = pneg %p174
    %p181 = scmp.eq.s32.totalorder %s13, 1
    %p182 = por %p180, %p181
    %p183 = scmp.ne.s32.totalorder %s175, %s178
    %p184 = scmp.eq.s32.totalorder %s13, 0
    %p185 = por %p183, %p184
    %p186 = scmp.ne.s32.totalorder %s175, %s178
    %p187 = scmp.eq.s32.totalorder %s18, 1
    %p188 = por %p186, %p187
    %p189 = scmp.ne.s32.totalorder %s178, %s179
    %p190 = scmp.eq.s32.totalorder %s18, 0
    %p191 = por %p189, %p190
    %p192 = scmp.ne.s32.totalorder %s178, %s179
    %p193 = scmp.eq.s32.totalorder %s19, 1
    %p194 = por %p192, %p193
    %p196 = scmp.ne.s32.totalorder %s179, %s195
    %p197 = scmp.eq.s32.totalorder %s19, 0
    %p198 = por %p196, %p197
    %p199 = scmp.le.s32.totalorder 1, %s13
    %p200 = scmp.lt.s32.totalorder %s13, 3
    %p201 = pnand %p199, %p200
    %p202 = pneg %p201
    // Predicated region
    $region9: #{_mlp_block_impl.1} parent=5 // pred_check
      _
    $region10: #{_mlp_block_impl.1} parent=5 // pred_check_branch
      %204 = sbr.rel (%p201) target = $region12
    $region11: #{_mlp_block_impl.1} parent=5 // pred_region
      %s205 = ssub.s32 %s13, 1
      // Predicated region
      $region13: #{_mlp_block_impl.1} parent=11 // pred_check
        %p206 = pneg %p60
      $region14: #{_mlp_block_impl.1} parent=11 // pred_check_branch
        %208 = sbr.rel (%p206) target = $region16
      $region15: #{_mlp_block_impl.1} parent=11 // pred_region
        _
      $region16: #{_mlp_block_impl.1} parent=11 // pred_fallthru
        _
      // Predicated region
      $region17: #{_mlp_block_impl.1} parent=11 // pred_check
        %p209 = pneg %p81
      $region18: #{_mlp_block_impl.1} parent=11 // pred_check_branch
        %211 = sbr.rel (%p209) target = $region20
      $region19: #{_mlp_block_impl.1} parent=11 // pred_region
        _
      $region20: #{_mlp_block_impl.1} parent=11 // pred_fallthru
        _
      // Predicated region
      $region21: #{_mlp_block_impl.1} parent=11 // pred_check
        %p212 = pneg %p102
      $region22: #{_mlp_block_impl.1} parent=11 // pred_check_branch
        %214 = sbr.rel (%p212) target = $region24
      $region23: #{_mlp_block_impl.1} parent=11 // pred_region
        _
      $region24: #{_mlp_block_impl.1} parent=11 // pred_fallthru
        _
      // Predicated region
      $region25: #{_mlp_block_impl.1} parent=11 // pred_check
        %p215 = pneg %p123
      $region26: #{_mlp_block_impl.1} parent=11 // pred_check_branch
        %217 = sbr.rel (%p215) target = $region28
      $region27: #{_mlp_block_impl.1} parent=11 // pred_region
        _
      $region28: #{_mlp_block_impl.1} parent=11 // pred_fallthru
        _
      // Predicated region
      $region29: #{_mlp_block_impl.1} parent=11 // pred_check
        %p218 = pneg %p144
      $region30: #{_mlp_block_impl.1} parent=11 // pred_check_branch
        %220 = sbr.rel (%p218) target = $region32
      $region31: #{_mlp_block_impl.1} parent=11 // pred_region
        _
      $region32: #{_mlp_block_impl.1} parent=11 // pred_fallthru
        _
      // Predicated region
      $region33: #{_mlp_block_impl.1} parent=11 // pred_check
        %p221 = pneg %p165
      $region34: #{_mlp_block_impl.1} parent=11 // pred_check_branch
        %223 = sbr.rel (%p221) target = $region36
      $region35: #{_mlp_block_impl.1} parent=11 // pred_region
        _
      $region36: #{_mlp_block_impl.1} parent=11 // pred_fallthru
        _
    $region12: #{_mlp_block_impl.1} parent=5 // pred_fallthru
      _
    %p224 = scmp.lt.s32.totalorder %s13, 2
    // Predicated region
    $region37: #{_mlp_block_impl.1} parent=5 // pred_check
      %p225 = pneg %p224
    $region38: #{_mlp_block_impl.1} parent=5 // pred_check_branch
      %227 = sbr.rel (%p225) target = $region40
    $region39: #{_mlp_block_impl.1} parent=5 // pred_region
      // Predicated region
      $region41: #{_mlp_block_impl.1} parent=39 // pred_check
        %p228 = pneg %p33
      $region42: #{_mlp_block_impl.1} parent=39 // pred_check_branch
        %230 = sbr.rel (%p228) target = $region44
      $region43: #{_mlp_block_impl.1} parent=39 // pred_region
        %s231 = smul.u32 25, %s13
        %p232 = scmp.lt.s32.totalorder %s231, 49
        %s233 = scalar_select %p232, %s231, 49
        %s234 = smul.addr %s233, 8
        %s235 = scalar_lea.vmem %s0, %s234
        %s236 = smul.u32 25, %s13
      $region44: #{_mlp_block_impl.1} parent=39 // pred_fallthru
        _
    $region40: #{_mlp_block_impl.1} parent=5 // pred_fallthru
      _
    %p237 = scmp.le.s32.totalorder 1, %s13
    %p238 = scmp.lt.s32.totalorder %s13, 3
    %p239 = pnand %p237, %p238
    %p240 = pneg %p239
    // Predicated region
    $region45: #{_mlp_block_impl.1} parent=5 // pred_check
      _
    $region46: #{_mlp_block_impl.1} parent=5 // pred_check_branch
      %242 = sbr.rel (%p239) target = $region48
    $region47: #{_mlp_block_impl.1} parent=5 // pred_region
      %s243 = ssub.s32 %s13, 1
      %s244 = smul.u32 25, %s18
      %p245 = scmp.lt.s32.totalorder %s244, 49
      %s246 = scalar_select %p245, %s244, 49
      %s247 = smul.addr %s246, 8
      %s248 = scalar_lea.vmem %s0, %s247
      %p249 = pneg %p39
      %p250 = pneg %p36
      %p251 = pneg %p60
      %p252 = pneg %p57
      %p253 = pneg %p81
      %p254 = pneg %p78
      %p255 = pneg %p102
      %p256 = pneg %p99
      %p257 = pneg %p123
      %p258 = pneg %p120
      %p259 = pneg %p144
      %p260 = pneg %p141
      %p261 = pneg %p165
      %p262 = pneg %p162
      %p263 = pneg %p191
      %p264 = pneg %p188
      %s265 = smul.u32 25, %s18
      %p266 = scmp.lt.s32.totalorder %s265, 49
      %s267 = scalar_select %p266, %s265, 49
      %s268 = smul.addr %s267, 8
      %s269 = scalar_lea.vmem %s7, %s268
      %s270 = smul.u32 25, %s18
      %p271 = scmp.lt.s32.totalorder %s270, 49
      %s272 = scalar_select %p271, %s270, 49
      %s273 = smul.addr %s272, 8
      %s274 = scalar_lea.vmem %s0, %s273
      %s275 = smul.u32 25, %s18
      %s276 = smul.u32 25, %s18
      %p277 = scmp.lt.s32.totalorder %s276, 49
      %s278 = scalar_select %p277, %s276, 49
      %s279 = smul.addr %s278, 8
      %s280 = scalar_lea.vmem %s7, %s279
      %s281 = smul.u32 25, %s18
      %v283 = vld [vmem:[%s274] sm:$0xff]
      %v284 = vld [vmem:[%s274 + $0x8] sm:$0xff]
      %v285 = vld [vmem:[%s274 + $0x10] sm:$0xff]
      %v286 = vld [vmem:[%s274 + $0x18] sm:$0xff]
      %v287 = vld [vmem:[%s274 + $0x20] sm:$0xff]
      %v288 = vld [vmem:[%s274 + $0x28] sm:$0xff]
      %v289 = vld [vmem:[%s274 + $0x30] sm:$0xff]
      %v290 = vld [vmem:[%s274 + $0x38] sm:$0xff]
      %v291 = vld [vmem:[%s274 + $0x40] sm:$0xff]
      %v292 = vld [vmem:[%s274 + $0x48] sm:$0xff]
      %v293 = vld [vmem:[%s274 + $0x50] sm:$0xff]
      %v294 = vld [vmem:[%s274 + $0x58] sm:$0xff]
      %v295 = vld [vmem:[%s274 + $0x60] sm:$0xff]
      %v296 = vld [vmem:[%s274 + $0x68] sm:$0xff]
      %v297 = vld [vmem:[%s274 + $0x70] sm:$0xff]
      %v298 = vld [vmem:[%s274 + $0x78] sm:$0xff]
      %v299 = vld [vmem:[%s274 + $0x80] sm:$0xff]
      %v300 = vld [vmem:[%s274 + $0x88] sm:$0xff]
      %v301 = vld [vmem:[%s274 + $0x90] sm:$0xff]
      %v302 = vld [vmem:[%s274 + $0x98] sm:$0xff]
      %v303 = vld [vmem:[%s274 + $0xa0] sm:$0xff]
      %v304 = vld [vmem:[%s274 + $0xa8] sm:$0xff]
      %v305 = vld [vmem:[%s274 + $0xb0] sm:$0xff]
      %v306 = vld [vmem:[%s274 + $0xb8] sm:$0xff]
      %v307 = vld [vmem:[%s274 + $0xc0] sm:$0xff]
      %308 = vadd.xlane.f32.xlu0 %v283
      %v309 = vpop.xlane.xlu0 %308
      %310 = vadd.xlane.f32.xlu0 %v284
      %v311 = vpop.xlane.xlu0 %310
      %312 = vadd.xlane.f32.xlu0 %v285
      %v313 = vpop.xlane.xlu0 %312
      %314 = vadd.xlane.f32.xlu0 %v286
      %v315 = vpop.xlane.xlu0 %314
      %316 = vadd.xlane.f32.xlu0 %v287
      %v317 = vpop.xlane.xlu0 %316
      %318 = vadd.xlane.f32.xlu0 %v288
      %v319 = vpop.xlane.xlu0 %318
      %320 = vadd.xlane.f32.xlu0 %v289
      %v321 = vpop.xlane.xlu0 %320
      %322 = vadd.xlane.f32.xlu0 %v290
      %v323 = vpop.xlane.xlu0 %322
      %324 = vadd.xlane.f32.xlu0 %v291
      %v325 = vpop.xlane.xlu0 %324
      %326 = vadd.xlane.f32.xlu0 %v292
      %v327 = vpop.xlane.xlu0 %326
      %328 = vadd.xlane.f32.xlu0 %v293
      %v329 = vpop.xlane.xlu0 %328
      %330 = vadd.xlane.f32.xlu0 %v294
      %v331 = vpop.xlane.xlu0 %330
      %332 = vadd.xlane.f32.xlu0 %v295
      %v333 = vpop.xlane.xlu0 %332
      %334 = vadd.xlane.f32.xlu0 %v296
      %v335 = vpop.xlane.xlu0 %334
      %336 = vadd.xlane.f32.xlu0 %v297
      %v337 = vpop.xlane.xlu0 %336
      %338 = vadd.xlane.f32.xlu0 %v298
      %v339 = vpop.xlane.xlu0 %338
      %340 = vadd.xlane.f32.xlu0 %v299
      %v341 = vpop.xlane.xlu0 %340
      %342 = vadd.xlane.f32.xlu0 %v300
      %v343 = vpop.xlane.xlu0 %342
      %344 = vadd.xlane.f32.xlu0 %v301
      %v345 = vpop.xlane.xlu0 %344
      %346 = vadd.xlane.f32.xlu0 %v302
      %v347 = vpop.xlane.xlu0 %346
      %348 = vadd.xlane.f32.xlu0 %v303
      %v349 = vpop.xlane.xlu0 %348
      %350 = vadd.xlane.f32.xlu0 %v304
      %v351 = vpop.xlane.xlu0 %350
      %352 = vadd.xlane.f32.xlu0 %v305
      %v353 = vpop.xlane.xlu0 %352
      %354 = vadd.xlane.f32.xlu0 %v306
      %v355 = vpop.xlane.xlu0 %354
      %356 = vadd.xlane.f32.xlu0 %v307
      %v357 = vpop.xlane.xlu0 %356
      %v358 = vrcp.pop 128.0
      %v359 = vmul.f32 %v309, %v358
      %v360 = vmul.f32 %v311, %v358
      %v361 = vmul.f32 %v313, %v358
      %v362 = vmul.f32 %v315, %v358
      %v363 = vmul.f32 %v317, %v358
      %v364 = vmul.f32 %v319, %v358
      %v365 = vmul.f32 %v321, %v358
      %v366 = vmul.f32 %v323, %v358
      %v367 = vmul.f32 %v325, %v358
      %v368 = vmul.f32 %v327, %v358
      %v369 = vmul.f32 %v329, %v358
      %v370 = vmul.f32 %v331, %v358
      %v371 = vmul.f32 %v333, %v358
      %v372 = vmul.f32 %v335, %v358
      %v373 = vmul.f32 %v337, %v358
      %v374 = vmul.f32 %v339, %v358
      %v375 = vmul.f32 %v341, %v358
      %v376 = vmul.f32 %v343, %v358
      %v377 = vmul.f32 %v345, %v358
      %v378 = vmul.f32 %v347, %v358
      %v379 = vmul.f32 %v349, %v358
      %v380 = vmul.f32 %v351, %v358
      %v381 = vmul.f32 %v353, %v358
      %v382 = vmul.f32 %v355, %v358
      %v383 = vmul.f32 %v357, %v358
      %v384 = vmul.f32 %v283, %v283
      %v385 = vmul.f32 %v284, %v284
      %v386 = vmul.f32 %v285, %v285
      %v387 = vmul.f32 %v286, %v286
      %v388 = vmul.f32 %v287, %v287
      %v389 = vmul.f32 %v288, %v288
      %v390 = vmul.f32 %v289, %v289
      %v391 = vmul.f32 %v290, %v290
      %v392 = vmul.f32 %v291, %v291
      %v393 = vmul.f32 %v292, %v292
      %v394 = vmul.f32 %v293, %v293
      %v395 = vmul.f32 %v294, %v294
      %v396 = vmul.f32 %v295, %v295
      %v397 = vmul.f32 %v296, %v296
      %v398 = vmul.f32 %v297, %v297
      %v399 = vmul.f32 %v298, %v298
      %v400 = vmul.f32 %v299, %v299
      %v401 = vmul.f32 %v300, %v300
      %v402 = vmul.f32 %v301, %v301
      %v403 = vmul.f32 %v302, %v302
      %v404 = vmul.f32 %v303, %v303
      %v405 = vmul.f32 %v304, %v304
      %v406 = vmul.f32 %v305, %v305
      %v407 = vmul.f32 %v306, %v306
      %v408 = vmul.f32 %v307, %v307
      %409 = vadd.xlane.f32.xlu0 %v384
      %v410 = vpop.xlane.xlu0 %409
      %411 = vadd.xlane.f32.xlu0 %v385
      %v412 = vpop.xlane.xlu0 %411
      %413 = vadd.xlane.f32.xlu0 %v386
      %v414 = vpop.xlane.xlu0 %413
      %415 = vadd.xlane.f32.xlu0 %v387
      %v416 = vpop.xlane.xlu0 %415
      %417 = vadd.xlane.f32.xlu0 %v388
      %v418 = vpop.xlane.xlu0 %417
      %419 = vadd.xlane.f32.xlu0 %v389
      %v420 = vpop.xlane.xlu0 %419
      %421 = vadd.xlane.f32.xlu0 %v390
      %v422 = vpop.xlane.xlu0 %421
      %423 = vadd.xlane.f32.xlu0 %v391
      %v424 = vpop.xlane.xlu0 %423
      %425 = vadd.xlane.f32.xlu0 %v392
      %v426 = vpop.xlane.xlu0 %425
      %427 = vadd.xlane.f32.xlu0 %v393
      %v428 = vpop.xlane.xlu0 %427
      %429 = vadd.xlane.f32.xlu0 %v394
      %v430 = vpop.xlane.xlu0 %429
      %431 = vadd.xlane.f32.xlu0 %v395
      %v432 = vpop.xlane.xlu0 %431
      %433 = vadd.xlane.f32.xlu0 %v396
      %v434 = vpop.xlane.xlu0 %433
      %435 = vadd.xlane.f32.xlu0 %v397
      %v436 = vpop.xlane.xlu0 %435
      %437 = vadd.xlane.f32.xlu0 %v398
      %v438 = vpop.xlane.xlu0 %437
      %439 = vadd.xlane.f32.xlu0 %v399
      %v440 = vpop.xlane.xlu0 %439
      %441 = vadd.xlane.f32.xlu0 %v400
      %v442 = vpop.xlane.xlu0 %441
      %443 = vadd.xlane.f32.xlu0 %v401
      %v444 = vpop.xlane.xlu0 %443
      %445 = vadd.xlane.f32.xlu0 %v402
      %v446 = vpop.xlane.xlu0 %445
      %447 = vadd.xlane.f32.xlu0 %v403
      %v448 = vpop.xlane.xlu0 %447
      %449 = vadd.xlane.f32.xlu0 %v404
      %v450 = vpop.xlane.xlu0 %449
      %451 = vadd.xlane.f32.xlu0 %v405
      %v452 = vpop.xlane.xlu0 %451
      %453 = vadd.xlane.f32.xlu0 %v406
      %v454 = vpop.xlane.xlu0 %453
      %455 = vadd.xlane.f32.xlu0 %v407
      %v456 = vpop.xlane.xlu0 %455
      %457 = vadd.xlane.f32.xlu0 %v408
      %v458 = vpop.xlane.xlu0 %457
      %v459 = vmul.f32 %v410, %v358
      %v460 = vmul.f32 %v412, %v358
      %v461 = vmul.f32 %v414, %v358
      %v462 = vmul.f32 %v416, %v358
      %v463 = vmul.f32 %v418, %v358
      %v464 = vmul.f32 %v420, %v358
      %v465 = vmul.f32 %v422, %v358
      %v466 = vmul.f32 %v424, %v358
      %v467 = vmul.f32 %v426, %v358
      %v468 = vmul.f32 %v428, %v358
      %v469 = vmul.f32 %v430, %v358
      %v470 = vmul.f32 %v432, %v358
      %v471 = vmul.f32 %v434, %v358
      %v472 = vmul.f32 %v436, %v358
      %v473 = vmul.f32 %v438, %v358
      %v474 = vmul.f32 %v440, %v358
      %v475 = vmul.f32 %v442, %v358
      %v476 = vmul.f32 %v444, %v358
      %v477 = vmul.f32 %v446, %v358
      %v478 = vmul.f32 %v448, %v358
      %v479 = vmul.f32 %v450, %v358
      %v480 = vmul.f32 %v452, %v358
      %v481 = vmul.f32 %v454, %v358
      %v482 = vmul.f32 %v456, %v358
      %v483 = vmul.f32 %v458, %v358
      %v484 = vmul.f32 %v359, %v359
      %v485 = vmul.f32 %v360, %v360
      %v486 = vmul.f32 %v361, %v361
      %v487 = vmul.f32 %v362, %v362
      %v488 = vmul.f32 %v363, %v363
      %v489 = vmul.f32 %v364, %v364
      %v490 = vmul.f32 %v365, %v365
      %v491 = vmul.f32 %v366, %v366
      %v492 = vmul.f32 %v367, %v367
      %v493 = vmul.f32 %v368, %v368
      %v494 = vmul.f32 %v369, %v369
      %v495 = vmul.f32 %v370, %v370
      %v496 = vmul.f32 %v371, %v371
      %v497 = vmul.f32 %v372, %v372
      %v498 = vmul.f32 %v373, %v373
      %v499 = vmul.f32 %v374, %v374
      %v500 = vmul.f32 %v375, %v375
      %v501 = vmul.f32 %v376, %v376
      %v502 = vmul.f32 %v377, %v377
      %v503 = vmul.f32 %v378, %v378
      %v504 = vmul.f32 %v379, %v379
      %v505 = vmul.f32 %v380, %v380
      %v506 = vmul.f32 %v381, %v381
      %v507 = vmul.f32 %v382, %v382
      %v508 = vmul.f32 %v383, %v383
      %v509 = vsub.f32 %v459, %v484
      %v510 = vsub.f32 %v460, %v485
      %v511 = vsub.f32 %v461, %v486
      %v512 = vsub.f32 %v462, %v487
      %v513 = vsub.f32 %v463, %v488
      %v514 = vsub.f32 %v464, %v489
      %v515 = vsub.f32 %v465, %v490
      %v516 = vsub.f32 %v466, %v491
      %v517 = vsub.f32 %v467, %v492
      %v518 = vsub.f32 %v468, %v493
      %v519 = vsub.f32 %v469, %v494
      %v520 = vsub.f32 %v470, %v495
      %v521 = vsub.f32 %v471, %v496
      %v522 = vsub.f32 %v472, %v497
      %v523 = vsub.f32 %v473, %v498
      %v524 = vsub.f32 %v474, %v499
      %v525 = vsub.f32 %v475, %v500
      %v526 = vsub.f32 %v476, %v501
      %v527 = vsub.f32 %v477, %v502
      %v528 = vsub.f32 %v478, %v503
      %v529 = vsub.f32 %v479, %v504
      %v530 = vsub.f32 %v480, %v505
      %v531 = vsub.f32 %v481, %v506
      %v532 = vsub.f32 %v482, %v507
      %v533 = vsub.f32 %v483, %v508
      %v534 = vmax.f32 %v509, 0.0
      %v535 = vmax.f32 %v510, 0.0
      %v536 = vmax.f32 %v511, 0.0
      %v537 = vmax.f32 %v512, 0.0
      %v538 = vmax.f32 %v513, 0.0
      %v539 = vmax.f32 %v514, 0.0
      %v540 = vmax.f32 %v515, 0.0
      %v541 = vmax.f32 %v516, 0.0
      %v542 = vmax.f32 %v517, 0.0
      %v543 = vmax.f32 %v518, 0.0
      %v544 = vmax.f32 %v519, 0.0
      %v545 = vmax.f32 %v520, 0.0
      %v546 = vmax.f32 %v521, 0.0
      %v547 = vmax.f32 %v522, 0.0
      %v548 = vmax.f32 %v523, 0.0
      %v549 = vmax.f32 %v524, 0.0
      %v550 = vmax.f32 %v525, 0.0
      %v551 = vmax.f32 %v526, 0.0
      %v552 = vmax.f32 %v527, 0.0
      %v553 = vmax.f32 %v528, 0.0
      %v554 = vmax.f32 %v529, 0.0
      %v555 = vmax.f32 %v530, 0.0
      %v556 = vmax.f32 %v531, 0.0
      %v557 = vmax.f32 %v532, 0.0
      %v558 = vmax.f32 %v533, 0.0
      %v559 = vadd.f32 %v534, 1e-05
      %v560 = vadd.f32 %v535, 1e-05
      %v561 = vadd.f32 %v536, 1e-05
      %v562 = vadd.f32 %v537, 1e-05
      %v563 = vadd.f32 %v538, 1e-05
      %v564 = vadd.f32 %v539, 1e-05
      %v565 = vadd.f32 %v540, 1e-05
      %v566 = vadd.f32 %v541, 1e-05
      %v567 = vadd.f32 %v542, 1e-05
      %v568 = vadd.f32 %v543, 1e-05
      %v569 = vadd.f32 %v544, 1e-05
      %v570 = vadd.f32 %v545, 1e-05
      %v571 = vadd.f32 %v546, 1e-05
      %v572 = vadd.f32 %v547, 1e-05
      %v573 = vadd.f32 %v548, 1e-05
      %v574 = vadd.f32 %v549, 1e-05
      %v575 = vadd.f32 %v550, 1e-05
      %v576 = vadd.f32 %v551, 1e-05
      %v577 = vadd.f32 %v552, 1e-05
      %v578 = vadd.f32 %v553, 1e-05
      %v579 = vadd.f32 %v554, 1e-05
      %v580 = vadd.f32 %v555, 1e-05
      %v581 = vadd.f32 %v556, 1e-05
      %v582 = vadd.f32 %v557, 1e-05
      %v583 = vadd.f32 %v558, 1e-05
      %v584 = vrsqrt.pop %v559
      %v585 = vrsqrt.pop %v560
      %v586 = vrsqrt.pop %v561
      %v587 = vrsqrt.pop %v562
      %v588 = vrsqrt.pop %v563
      %v589 = vrsqrt.pop %v564
      %v590 = vrsqrt.pop %v565
      %v591 = vrsqrt.pop %v566
      %v592 = vrsqrt.pop %v567
      %v593 = vrsqrt.pop %v568
      %v594 = vrsqrt.pop %v569
      %v595 = vrsqrt.pop %v570
      %v596 = vrsqrt.pop %v571
      %v597 = vrsqrt.pop %v572
      %v598 = vrsqrt.pop %v573
      %v599 = vrsqrt.pop %v574
      %v600 = vrsqrt.pop %v575
      %v601 = vrsqrt.pop %v576
      %v602 = vrsqrt.pop %v577
      %v603 = vrsqrt.pop %v578
      %v604 = vrsqrt.pop %v579
      %v605 = vrsqrt.pop %v580
      %v606 = vrsqrt.pop %v581
      %v607 = vrsqrt.pop %v582
      %v608 = vrsqrt.pop %v583
      %v609 = vsub.f32 %v283, %v359
      %v610 = vsub.f32 %v284, %v360
      %v611 = vsub.f32 %v285, %v361
      %v612 = vsub.f32 %v286, %v362
      %v613 = vsub.f32 %v287, %v363
      %v614 = vsub.f32 %v288, %v364
      %v615 = vsub.f32 %v289, %v365
      %v616 = vsub.f32 %v290, %v366
      %v617 = vsub.f32 %v291, %v367
      %v618 = vsub.f32 %v292, %v368
      %v619 = vsub.f32 %v293, %v369
      %v620 = vsub.f32 %v294, %v370
      %v621 = vsub.f32 %v295, %v371
      %v622 = vsub.f32 %v296, %v372
      %v623 = vsub.f32 %v297, %v373
      %v624 = vsub.f32 %v298, %v374
      %v625 = vsub.f32 %v299, %v375
      %v626 = vsub.f32 %v300, %v376
      %v627 = vsub.f32 %v301, %v377
      %v628 = vsub.f32 %v302, %v378
      %v629 = vsub.f32 %v303, %v379
      %v630 = vsub.f32 %v304, %v380
      %v631 = vsub.f32 %v305, %v381
      %v632 = vsub.f32 %v306, %v382
      %v633 = vsub.f32 %v307, %v383
      %v634 = vmul.f32 %v609, %v584
      %v635 = vmul.f32 %v610, %v585
      %v636 = vmul.f32 %v611, %v586
      %v637 = vmul.f32 %v612, %v587
      %v638 = vmul.f32 %v613, %v588
      %v639 = vmul.f32 %v614, %v589
      %v640 = vmul.f32 %v615, %v590
      %v641 = vmul.f32 %v616, %v591
      %v642 = vmul.f32 %v617, %v592
      %v643 = vmul.f32 %v618, %v593
      %v644 = vmul.f32 %v619, %v594
      %v645 = vmul.f32 %v620, %v595
      %v646 = vmul.f32 %v621, %v596
      %v647 = vmul.f32 %v622, %v597
      %v648 = vmul.f32 %v623, %v598
      %v649 = vmul.f32 %v624, %v599
      %v650 = vmul.f32 %v625, %v600
      %v651 = vmul.f32 %v626, %v601
      %v652 = vmul.f32 %v627, %v602
      %v653 = vmul.f32 %v628, %v603
      %v654 = vmul.f32 %v629, %v604
      %v655 = vmul.f32 %v630, %v605
      %v656 = vmul.f32 %v631, %v606
      %v657 = vmul.f32 %v632, %v607
      %v658 = vmul.f32 %v633, %v608
      %v659 = vld [vmem:[%s1] sm:$0x1]
      %v661 = vlaneseq
      %v662 = vshrl.u32 %v661, 7
      %v663 = vsub.s32 0, %v662
      %v664 = vrot.slane %v659, %v663
      %v666 = vmul.f32 %v634, %v664
      %v667 = vmul.f32 %v635, %v664
      %v668 = vmul.f32 %v636, %v664
      %v669 = vmul.f32 %v637, %v664
      %v670 = vmul.f32 %v638, %v664
      %v671 = vmul.f32 %v639, %v664
      %v672 = vmul.f32 %v640, %v664
      %v673 = vmul.f32 %v641, %v664
      %v674 = vmul.f32 %v642, %v664
      %v675 = vmul.f32 %v643, %v664
      %v676 = vmul.f32 %v644, %v664
      %v677 = vmul.f32 %v645, %v664
      %v678 = vmul.f32 %v646, %v664
      %v679 = vmul.f32 %v647, %v664
      %v680 = vmul.f32 %v648, %v664
      %v681 = vmul.f32 %v649, %v664
      %v682 = vmul.f32 %v650, %v664
      %v683 = vmul.f32 %v651, %v664
      %v684 = vmul.f32 %v652, %v664
      %v685 = vmul.f32 %v653, %v664
      %v686 = vmul.f32 %v654, %v664
      %v687 = vmul.f32 %v655, %v664
      %v688 = vmul.f32 %v656, %v664
      %v689 = vmul.f32 %v657, %v664
      %v690 = vmul.f32 %v658, %v664
      %v691 = vld [vmem:[%s2] sm:$0x1]
      %v693 = vlaneseq
      %v694 = vshrl.u32 %v693, 7
      %v695 = vsub.s32 0, %v694
      %v696 = vrot.slane %v691, %v695
      %v698 = vadd.f32 %v666, %v696
      %v699 = vadd.f32 %v667, %v696
      %v700 = vadd.f32 %v668, %v696
      %v701 = vadd.f32 %v669, %v696
      %v702 = vadd.f32 %v670, %v696
      %v703 = vadd.f32 %v671, %v696
      %v704 = vadd.f32 %v672, %v696
      %v705 = vadd.f32 %v673, %v696
      %v706 = vadd.f32 %v674, %v696
      %v707 = vadd.f32 %v675, %v696
      %v708 = vadd.f32 %v676, %v696
      %v709 = vadd.f32 %v677, %v696
      %v710 = vadd.f32 %v678, %v696
      %v711 = vadd.f32 %v679, %v696
      %v712 = vadd.f32 %v680, %v696
      %v713 = vadd.f32 %v681, %v696
      %v714 = vadd.f32 %v682, %v696
      %v715 = vadd.f32 %v683, %v696
      %v716 = vadd.f32 %v684, %v696
      %v717 = vadd.f32 %v685, %v696
      %v718 = vadd.f32 %v686, %v696
      %v719 = vadd.f32 %v687, %v696
      %v720 = vadd.f32 %v688, %v696
      %v721 = vadd.f32 %v689, %v696
      %v722 = vadd.f32 %v690, %v696
      %v723 = vpack.c.bf16 %v699, %v698
      %v724 = vpack.c.bf16 %v701, %v700
      %v725 = vpack.c.bf16 %v703, %v702
      %v726 = vpack.c.bf16 %v705, %v704
      %v727 = vpack.c.bf16 %v707, %v706
      %v728 = vpack.c.bf16 %v709, %v708
      %v729 = vpack.c.bf16 %v711, %v710
      %v730 = vpack.c.bf16 %v713, %v712
      %v731 = vpack.c.bf16 %v715, %v714
      %v732 = vpack.c.bf16 %v717, %v716
      %v733 = vpack.c.bf16 %v719, %v718
      %v734 = vpack.c.bf16 %v721, %v720
      %v735 = vpack.c.bf16 %v722, %v722
      %v736 = vld [vmem:[%s3] sm:$0xff]
      %v737 = vld [vmem:[%s3 + $0x8] sm:$0xff]
      %v738 = vld [vmem:[%s3 + $0x10] sm:$0xff]
      %v739 = vld [vmem:[%s3 + $0x18] sm:$0xff]
      %v740 = vld [vmem:[%s3 + $0x20] sm:$0xff]
      %v741 = vld [vmem:[%s3 + $0x28] sm:$0xff]
      %v742 = vld [vmem:[%s3 + $0x30] sm:$0xff]
      %v743 = vld [vmem:[%s3 + $0x38] sm:$0xff]
      %v744 = vld [vmem:[%s3 + $0x40] sm:$0xff]
      %v745 = vld [vmem:[%s3 + $0x48] sm:$0xff]
      %v746 = vld [vmem:[%s3 + $0x50] sm:$0xff]
      %v747 = vld [vmem:[%s3 + $0x58] sm:$0xff]
      %v748 = vld [vmem:[%s3 + $0x60] sm:$0xff]
      %v749 = vld [vmem:[%s3 + $0x68] sm:$0xff]
      %v750 = vld [vmem:[%s3 + $0x70] sm:$0xff]
      %v751 = vld [vmem:[%s3 + $0x78] sm:$0xff]
      %v752 = vld [vmem:[%s3 + $0x80] sm:$0xff]
      %v753 = vld [vmem:[%s3 + $0x88] sm:$0xff]
      %v754 = vld [vmem:[%s3 + $0x90] sm:$0xff]
      %v755 = vld [vmem:[%s3 + $0x98] sm:$0xff]
      %v756 = vld [vmem:[%s3 + $0xa0] sm:$0xff]
      %v757 = vld [vmem:[%s3 + $0xa8] sm:$0xff]
      %v758 = vld [vmem:[%s3 + $0xb0] sm:$0xff]
      %v759 = vld [vmem:[%s3 + $0xb8] sm:$0xff]
      %v760 = vld [vmem:[%s3 + $0xc0] sm:$0xff]
      %v761 = vld [vmem:[%s3 + $0xc8] sm:$0xff]
      %v762 = vld [vmem:[%s3 + $0xd0] sm:$0xff]
      %v763 = vld [vmem:[%s3 + $0xd8] sm:$0xff]
      %v764 = vld [vmem:[%s3 + $0xe0] sm:$0xff]
      %v765 = vld [vmem:[%s3 + $0xe8] sm:$0xff]
      %v766 = vld [vmem:[%s3 + $0xf0] sm:$0xff]
      %v767 = vld [vmem:[%s3 + $0xf8] sm:$0xff]
      %v768 = vld [vmem:[%s4] sm:$0xf]
      %v770 = vlaneseq
      %v771 = vshrl.u32 %v770, 7
      %v772 = vsub.s32 0, %v771
      %v773 = vrot.slane %v768, %v772
      %v774 = vlaneseq
      %v775 = vshrl.u32 %v774, 7
      %v776 = vsub.s32 1, %v775
      %v777 = vrot.slane %v768, %v776
      %v778 = vlaneseq
      %v779 = vshrl.u32 %v778, 7
      %v780 = vsub.s32 2, %v779
      %v781 = vrot.slane %v768, %v780
      %v782 = vlaneseq
      %v783 = vshrl.u32 %v782, 7
      %v784 = vsub.s32 3, %v783
      %v785 = vrot.slane %v768, %v784
      %v822 = vunpack.c.l.b16 %v736
      %v823 = vunpack.c.h.b16 %v736
      %v824 = vunpack.c.l.b16 %v737
      %v825 = vunpack.c.h.b16 %v737
      %v826 = vunpack.c.l.b16 %v738
      %v827 = vunpack.c.h.b16 %v738
      %v828 = vunpack.c.l.b16 %v739
      %v829 = vunpack.c.h.b16 %v739
      %v830 = vunpack.c.l.b16 %v740
      %v831 = vunpack.c.h.b16 %v740
      %v832 = vunpack.c.l.b16 %v741
      %v833 = vunpack.c.h.b16 %v741
      %v834 = vunpack.c.l.b16 %v742
      %v835 = vunpack.c.h.b16 %v742
      %v836 = vunpack.c.l.b16 %v743
      %v837 = vunpack.c.h.b16 %v743
      %v838 = vunpack.c.l.b16 %v744
      %v839 = vunpack.c.h.b16 %v744
      %v840 = vunpack.c.l.b16 %v745
      %v841 = vunpack.c.h.b16 %v745
      %v842 = vunpack.c.l.b16 %v746
      %v843 = vunpack.c.h.b16 %v746
      %v844 = vunpack.c.l.b16 %v747
      %v845 = vunpack.c.h.b16 %v747
      %v846 = vunpack.c.l.b16 %v748
      %v847 = vunpack.c.h.b16 %v748
      %v848 = vunpack.c.l.b16 %v749
      %v849 = vunpack.c.h.b16 %v749
      %v850 = vunpack.c.l.b16 %v750
      %v851 = vunpack.c.h.b16 %v750
      %v852 = vunpack.c.l.b16 %v751
      %v853 = vunpack.c.h.b16 %v751
      %v854 = vunpack.c.l.b16 %v752
      %v855 = vunpack.c.h.b16 %v752
      %v856 = vunpack.c.l.b16 %v753
      %v857 = vunpack.c.h.b16 %v753
      %v858 = vunpack.c.l.b16 %v754
      %v859 = vunpack.c.h.b16 %v754
      %v860 = vunpack.c.l.b16 %v755
      %v861 = vunpack.c.h.b16 %v755
      %v862 = vunpack.c.l.b16 %v756
      %v863 = vunpack.c.h.b16 %v756
      %v864 = vunpack.c.l.b16 %v757
      %v865 = vunpack.c.h.b16 %v757
      %v866 = vunpack.c.l.b16 %v758
      %v867 = vunpack.c.h.b16 %v758
      %v868 = vunpack.c.l.b16 %v759
      %v869 = vunpack.c.h.b16 %v759
      %v870 = vunpack.c.l.b16 %v760
      %v871 = vunpack.c.h.b16 %v760
      %v872 = vunpack.c.l.b16 %v761
      %v873 = vunpack.c.h.b16 %v761
      %v874 = vunpack.c.l.b16 %v762
      %v875 = vunpack.c.h.b16 %v762
      %v876 = vunpack.c.l.b16 %v763
      %v877 = vunpack.c.h.b16 %v763
      %v878 = vunpack.c.l.b16 %v764
      %v879 = vunpack.c.h.b16 %v764
      %v880 = vunpack.c.l.b16 %v765
      %v881 = vunpack.c.h.b16 %v765
      %v882 = vunpack.c.l.b16 %v766
      %v883 = vunpack.c.h.b16 %v766
      %v884 = vunpack.c.l.b16 %v767
      %v885 = vunpack.c.h.b16 %v767
      %v886 = vpack.c.b16 %v826, %v822
      %v887 = vpack.c.b16 %v827, %v823
      %v888 = vpack.c.b16 %v828, %v824
      %v889 = vpack.c.b16 %v829, %v825
      %v890 = vpack.c.b16 %v834, %v830
      %v891 = vpack.c.b16 %v835, %v831
      %v892 = vpack.c.b16 %v836, %v832
      %v893 = vpack.c.b16 %v837, %v833
      %v894 = vpack.c.b16 %v842, %v838
      %v895 = vpack.c.b16 %v843, %v839
      %v896 = vpack.c.b16 %v844, %v840
      %v897 = vpack.c.b16 %v845, %v841
      %v898 = vpack.c.b16 %v850, %v846
      %v899 = vpack.c.b16 %v851, %v847
      %v900 = vpack.c.b16 %v852, %v848
      %v901 = vpack.c.b16 %v853, %v849
      %v902 = vpack.c.b16 %v858, %v854
      %v903 = vpack.c.b16 %v859, %v855
      %v904 = vpack.c.b16 %v860, %v856
      %v905 = vpack.c.b16 %v861, %v857
      %v906 = vpack.c.b16 %v866, %v862
      %v907 = vpack.c.b16 %v867, %v863
      %v908 = vpack.c.b16 %v868, %v864
      %v909 = vpack.c.b16 %v869, %v865
      %v910 = vpack.c.b16 %v874, %v870
      %v911 = vpack.c.b16 %v875, %v871
      %v912 = vpack.c.b16 %v876, %v872
      %v913 = vpack.c.b16 %v877, %v873
      %v914 = vpack.c.b16 %v882, %v878
      %v915 = vpack.c.b16 %v883, %v879
      %v916 = vpack.c.b16 %v884, %v880
      %v917 = vpack.c.b16 %v885, %v881
      %950 = vmatprep.subr.bf16.mxu0 %v915
      %951 = vmatpush1.bf16.msra.mxu0 %v914
      %952 = vmatprep.subr.bf16.mxu0 %v911
      %953 = vmatpush1.bf16.msra.mxu0 %v910
      %954 = vmatprep.subr.bf16.mxu0 %v907
      %955 = vmatpush1.bf16.msra.mxu0 %v906
      %956 = vmatprep.subr.bf16.mxu0 %v903
      %957 = vmatpush1.bf16.msra.mxu0 %v902
      %958 = vmatprep.subr.bf16.mxu0 %v899
      %959 = vmatpush1.bf16.msra.mxu0 %v898
      %960 = vmatprep.subr.bf16.mxu0 %v895
      %961 = vmatpush1.bf16.msra.mxu0 %v894
      %962 = vmatprep.subr.bf16.mxu0 %v891
      %963 = vmatpush1.bf16.msra.mxu0 %v890
      %964 = vmatprep.subr.bf16.mxu0 %v887
      %965 = vmatpush1.bf16.msra.mxu0 %v886
      %966 = vmatprep.subr.bf16.mxu0 0
      %967 = vmatpush2.bf16.msra.mxu0 0
      %968 = vmatprep.subr.bf16.mxu0 0
      %969 = vmatpush2.bf16.msra.mxu0 0
      %970 = vmatprep.subr.bf16.mxu0 0
      %971 = vmatpush2.bf16.msra.mxu0 0
      %972 = vmatprep.subr.bf16.mxu0 0
      %973 = vmatpush2.bf16.msra.mxu0 0
      %974 = vmatprep.subr.bf16.mxu0 0
      %975 = vmatpush2.bf16.msra.mxu0 0
      %976 = vmatprep.subr.bf16.mxu0 0
      %977 = vmatpush2.bf16.msra.mxu0 0
      %978 = vmatprep.subr.bf16.mxu0 0
      %979 = vmatpush2.bf16.msra.mxu0 0
      %980 = vmatprep.subr.bf16.mxu0 0
      %981 = vmatpush2.bf16.msra.mxu0 0
      %982 = vmatprep.mubr.bf16.mxu0 0
      %983 = vmatmul.mubr.bf16.gmra.mxu0 %v723
      %v984 = vpop.f32.mrf.mxu0
      %v985 = vadd.f32 %v773, %v984
      %v986 = vpop.f32.mrf.mxu0
      %v987 = vadd.f32 %v777, %v986
      %v988 = vpop.f32.mrf.mxu0
      %v989 = vadd.f32 %v773, %v988
      %v990 = vpop.f32.mrf.mxu0
      %v991 = vadd.f32 %v777, %v990
      %992 = vmatprep.mubr.bf16.mxu0 0
      %993 = vmatmul.mubr.bf16.gmra.mxu0 %v724
      %v994 = vpop.f32.mrf.mxu0
      %v995 = vadd.f32 %v773, %v994
      %v996 = vpop.f32.mrf.mxu0
      %v997 = vadd.f32 %v777, %v996
      %v998 = vpop.f32.mrf.mxu0
      %v999 = vadd.f32 %v773, %v998
      %v1000 = vpop.f32.mrf.mxu0
      %v1001 = vadd.f32 %v777, %v1000
      %1002 = vmatprep.mubr.bf16.mxu0 0
      %1003 = vmatmul.mubr.bf16.gmra.mxu0 %v725
      %v1004 = vpop.f32.mrf.mxu0
      %v1005 = vadd.f32 %v773, %v1004
      %v1006 = vpop.f32.mrf.mxu0
      %v1007 = vadd.f32 %v777, %v1006
      %v1008 = vpop.f32.mrf.mxu0
      %v1009 = vadd.f32 %v773, %v1008
      %v1010 = vpop.f32.mrf.mxu0
      %v1011 = vadd.f32 %v777, %v1010
      %1012 = vmatprep.mubr.bf16.mxu0 0
      %1013 = vmatmul.mubr.bf16.gmra.mxu0 %v726
      %v1014 = vpop.f32.mrf.mxu0
      %v1015 = vadd.f32 %v773, %v1014
      %v1016 = vpop.f32.mrf.mxu0
      %v1017 = vadd.f32 %v777, %v1016
      %v1018 = vpop.f32.mrf.mxu0
      %v1019 = vadd.f32 %v773, %v1018
      %v1020 = vpop.f32.mrf.mxu0
      %v1021 = vadd.f32 %v777, %v1020
      %1022 = vmatprep.mubr.bf16.mxu0 0
      %1023 = vmatmul.mubr.bf16.gmra.mxu0 %v727
      %v1024 = vpop.f32.mrf.mxu0
      %v1025 = vadd.f32 %v773, %v1024
      %v1026 = vpop.f32.mrf.mxu0
      %v1027 = vadd.f32 %v777, %v1026
      %v1028 = vpop.f32.mrf.mxu0
      %v1029 = vadd.f32 %v773, %v1028
      %v1030 = vpop.f32.mrf.mxu0
      %v1031 = vadd.f32 %v777, %v1030
      %1032 = vmatprep.mubr.bf16.mxu0 0
      %1033 = vmatmul.mubr.bf16.gmra.mxu0 %v728
      %v1034 = vpop.f32.mrf.mxu0
      %v1035 = vadd.f32 %v773, %v1034
      %v1036 = vpop.f32.mrf.mxu0
      %v1037 = vadd.f32 %v777, %v1036
      %v1038 = vpop.f32.mrf.mxu0
      %v1039 = vadd.f32 %v773, %v1038
      %v1040 = vpop.f32.mrf.mxu0
      %v1041 = vadd.f32 %v777, %v1040
      %1042 = vmatprep.mubr.bf16.mxu0 0
      %1043 = vmatmul.mubr.bf16.gmra.mxu0 %v729
      %v1044 = vpop.f32.mrf.mxu0
      %v1045 = vadd.f32 %v773, %v1044
      %v1046 = vpop.f32.mrf.mxu0
      %v1047 = vadd.f32 %v777, %v1046
      %v1048 = vpop.f32.mrf.mxu0
      %v1049 = vadd.f32 %v773, %v1048
      %v1050 = vpop.f32.mrf.mxu0
      %v1051 = vadd.f32 %v777, %v1050
      %1052 = vmatprep.mubr.bf16.mxu0 0
      %1053 = vmatmul.mubr.bf16.gmra.mxu0 %v730
      %v1054 = vpop.f32.mrf.mxu0
      %v1055 = vadd.f32 %v773, %v1054
      %v1056 = vpop.f32.mrf.mxu0
      %v1057 = vadd.f32 %v777, %v1056
      %v1058 = vpop.f32.mrf.mxu0
      %v1059 = vadd.f32 %v773, %v1058
      %v1060 = vpop.f32.mrf.mxu0
      %v1061 = vadd.f32 %v777, %v1060
      %1062 = vmatprep.mubr.bf16.mxu0 0
      %1063 = vmatmul.mubr.bf16.gmra.mxu0 %v731
      %v1064 = vpop.f32.mrf.mxu0
      %v1065 = vadd.f32 %v773, %v1064
      %v1066 = vpop.f32.mrf.mxu0
      %v1067 = vadd.f32 %v777, %v1066
      %v1068 = vpop.f32.mrf.mxu0
      %v1069 = vadd.f32 %v773, %v1068
      %v1070 = vpop.f32.mrf.mxu0
      %v1071 = vadd.f32 %v777, %v1070
      %1072 = vmatprep.mubr.bf16.mxu0 0
      %1073 = vmatmul.mubr.bf16.gmra.mxu0 %v732
      %v1074 = vpop.f32.mrf.mxu0
      %v1075 = vadd.f32 %v773, %v1074
      %v1076 = vpop.f32.mrf.mxu0
      %v1077 = vadd.f32 %v777, %v1076
      %v1078 = vpop.f32.mrf.mxu0
      %v1079 = vadd.f32 %v773, %v1078
      %v1080 = vpop.f32.mrf.mxu0
      %v1081 = vadd.f32 %v777, %v1080
      %1082 = vmatprep.mubr.bf16.mxu0 0
      %1083 = vmatmul.mubr.bf16.gmra.mxu0 %v733
      %v1084 = vpop.f32.mrf.mxu0
      %v1085 = vadd.f32 %v773, %v1084
      %v1086 = vpop.f32.mrf.mxu0
      %v1087 = vadd.f32 %v777, %v1086
      %v1088 = vpop.f32.mrf.mxu0
      %v1089 = vadd.f32 %v773, %v1088
      %v1090 = vpop.f32.mrf.mxu0
      %v1091 = vadd.f32 %v777, %v1090
      %1092 = vmatprep.mubr.bf16.mxu0 0
      %1093 = vmatmul.mubr.bf16.gmra.mxu0 %v734
      %v1094 = vpop.f32.mrf.mxu0
      %v1095 = vadd.f32 %v773, %v1094
      %v1096 = vpop.f32.mrf.mxu0
      %v1097 = vadd.f32 %v777, %v1096
      %v1098 = vpop.f32.mrf.mxu0
      %v1099 = vadd.f32 %v773, %v1098
      %v1100 = vpop.f32.mrf.mxu0
      %v1101 = vadd.f32 %v777, %v1100
      %1102 = vmatprep.mubr.bf16.mxu0 0
      %1103 = vmatmul.mubr.bf16.gmra.mxu0 %v735
      %v1104 = vpop.f32.mrf.mxu0
      %v1105 = vadd.f32 %v773, %v1104
      %v1106 = vpop.f32.mrf.mxu0
      %v1107 = vadd.f32 %v777, %v1106
      %v1108 = vpop.f32.mrf.mxu0
      %v1109 = vpop.f32.mrf.mxu0
      %1110 = vdwg.mxu0
      %1111 = vmatprep.subr.bf16.mxu0 %v917
      %1112 = vmatpush1.bf16.msra.mxu0 %v916
      %1113 = vmatprep.subr.bf16.mxu0 %v913
      %1114 = vmatpush1.bf16.msra.mxu0 %v912
      %1115 = vmatprep.subr.bf16.mxu0 %v909
      %1116 = vmatpush1.bf16.msra.mxu0 %v908
      %1117 = vmatprep.subr.bf16.mxu0 %v905
      %1118 = vmatpush1.bf16.msra.mxu0 %v904
      %1119 = vmatprep.subr.bf16.mxu0 %v901
      %1120 = vmatpush1.bf16.msra.mxu0 %v900
      %1121 = vmatprep.subr.bf16.mxu0 %v897
      %1122 = vmatpush1.bf16.msra.mxu0 %v896
      %1123 = vmatprep.subr.bf16.mxu0 %v893
      %1124 = vmatpush1.bf16.msra.mxu0 %v892
      %1125 = vmatprep.subr.bf16.mxu0 %v889
      %1126 = vmatpush1.bf16.msra.mxu0 %v888
      %1127 = vmatprep.subr.bf16.mxu0 0
      %1128 = vmatpush2.bf16.msra.mxu0 0
      %1129 = vmatprep.subr.bf16.mxu0 0
      %1130 = vmatpush2.bf16.msra.mxu0 0
      %1131 = vmatprep.subr.bf16.mxu0 0
      %1132 = vmatpush2.bf16.msra.mxu0 0
      %1133 = vmatprep.subr.bf16.mxu0 0
      %1134 = vmatpush2.bf16.msra.mxu0 0
      %1135 = vmatprep.subr.bf16.mxu0 0
      %1136 = vmatpush2.bf16.msra.mxu0 0
      %1137 = vmatprep.subr.bf16.mxu0 0
      %1138 = vmatpush2.bf16.msra.mxu0 0
      %1139 = vmatprep.subr.bf16.mxu0 0
      %1140 = vmatpush2.bf16.msra.mxu0 0
      %1141 = vmatprep.subr.bf16.mxu0 0
      %1142 = vmatpush2.bf16.msra.mxu0 0
      %1143 = vmatprep.mubr.bf16.mxu0 0
      %1144 = vmatmul.mubr.bf16.gmra.mxu0 %v723
      %v1145 = vpop.f32.mrf.mxu0
      %v1146 = vadd.f32 %v781, %v1145
      %v1147 = vpop.f32.mrf.mxu0
      %v1148 = vadd.f32 %v785, %v1147
      %v1149 = vpop.f32.mrf.mxu0
      %v1150 = vadd.f32 %v781, %v1149
      %v1151 = vpop.f32.mrf.mxu0
      %v1152 = vadd.f32 %v785, %v1151
      %1153 = vmatprep.mubr.bf16.mxu0 0
      %1154 = vmatmul.mubr.bf16.gmra.mxu0 %v724
      %v1155 = vpop.f32.mrf.mxu0
      %v1156 = vadd.f32 %v781, %v1155
      %v1157 = vpop.f32.mrf.mxu0
      %v1158 = vadd.f32 %v785, %v1157
      %v1159 = vpop.f32.mrf.mxu0
      %v1160 = vadd.f32 %v781, %v1159
      %v1161 = vpop.f32.mrf.mxu0
      %v1162 = vadd.f32 %v785, %v1161
      %1163 = vmatprep.mubr.bf16.mxu0 0
      %1164 = vmatmul.mubr.bf16.gmra.mxu0 %v725
      %v1165 = vpop.f32.mrf.mxu0
      %v1166 = vadd.f32 %v781, %v1165
      %v1167 = vpop.f32.mrf.mxu0
      %v1168 = vadd.f32 %v785, %v1167
      %v1169 = vpop.f32.mrf.mxu0
      %v1170 = vadd.f32 %v781, %v1169
      %v1171 = vpop.f32.mrf.mxu0
      %v1172 = vadd.f32 %v785, %v1171
      %1173 = vmatprep.mubr.bf16.mxu0 0
      %1174 = vmatmul.mubr.bf16.gmra.mxu0 %v726
      %v1175 = vpop.f32.mrf.mxu0
      %v1176 = vadd.f32 %v781, %v1175
      %v1177 = vpop.f32.mrf.mxu0
      %v1178 = vadd.f32 %v785, %v1177
      %v1179 = vpop.f32.mrf.mxu0
      %v1180 = vadd.f32 %v781, %v1179
      %v1181 = vpop.f32.mrf.mxu0
      %v1182 = vadd.f32 %v785, %v1181
      %1183 = vmatprep.mubr.bf16.mxu0 0
      %1184 = vmatmul.mubr.bf16.gmra.mxu0 %v727
      %v1185 = vpop.f32.mrf.mxu0
      %v1186 = vadd.f32 %v781, %v1185
      %v1187 = vpop.f32.mrf.mxu0
      %v1188 = vadd.f32 %v785, %v1187
      %v1189 = vpop.f32.mrf.mxu0
      %v1190 = vadd.f32 %v781, %v1189
      %v1191 = vpop.f32.mrf.mxu0
      %v1192 = vadd.f32 %v785, %v1191
      %1193 = vmatprep.mubr.bf16.mxu0 0
      %1194 = vmatmul.mubr.bf16.gmra.mxu0 %v728
      %v1195 = vpop.f32.mrf.mxu0
      %v1196 = vadd.f32 %v781, %v1195
      %v1197 = vpop.f32.mrf.mxu0
      %v1198 = vadd.f32 %v785, %v1197
      %v1199 = vpop.f32.mrf.mxu0
      %v1200 = vadd.f32 %v781, %v1199
      %v1201 = vpop.f32.mrf.mxu0
      %v1202 = vadd.f32 %v785, %v1201
      %1203 = vmatprep.mubr.bf16.mxu0 0
      %1204 = vmatmul.mubr.bf16.gmra.mxu0 %v729
      %v1205 = vpop.f32.mrf.mxu0
      %v1206 = vadd.f32 %v781, %v1205
      %v1207 = vpop.f32.mrf.mxu0
      %v1208 = vadd.f32 %v785, %v1207
      %v1209 = vpop.f32.mrf.mxu0
      %v1210 = vadd.f32 %v781, %v1209
      %v1211 = vpop.f32.mrf.mxu0
      %v1212 = vadd.f32 %v785, %v1211
      %1213 = vmatprep.mubr.bf16.mxu0 0
      %1214 = vmatmul.mubr.bf16.gmra.mxu0 %v730
      %v1215 = vpop.f32.mrf.mxu0
      %v1216 = vadd.f32 %v781, %v1215
      %v1217 = vpop.f32.mrf.mxu0
      %v1218 = vadd.f32 %v785, %v1217
      %v1219 = vpop.f32.mrf.mxu0
      %v1220 = vadd.f32 %v781, %v1219
      %v1221 = vpop.f32.mrf.mxu0
      %v1222 = vadd.f32 %v785, %v1221
      %1223 = vmatprep.mubr.bf16.mxu0 0
      %1224 = vmatmul.mubr.bf16.gmra.mxu0 %v731
      %v1225 = vpop.f32.mrf.mxu0
      %v1226 = vadd.f32 %v781, %v1225
      %v1227 = vpop.f32.mrf.mxu0
      %v1228 = vadd.f32 %v785, %v1227
      %v1229 = vpop.f32.mrf.mxu0
      %v1230 = vadd.f32 %v781, %v1229
      %v1231 = vpop.f32.mrf.mxu0
      %v1232 = vadd.f32 %v785, %v1231
      %1233 = vmatprep.mubr.bf16.mxu0 0
      %1234 = vmatmul.mubr.bf16.gmra.mxu0 %v732
      %v1235 = vpop.f32.mrf.mxu0
      %v1236 = vadd.f32 %v781, %v1235
      %v1237 = vpop.f32.mrf.mxu0
      %v1238 = vadd.f32 %v785, %v1237
      %v1239 = vpop.f32.mrf.mxu0
      %v1240 = vadd.f32 %v781, %v1239
      %v1241 = vpop.f32.mrf.mxu0
      %v1242 = vadd.f32 %v785, %v1241
      %1243 = vmatprep.mubr.bf16.mxu0 0
      %1244 = vmatmul.mubr.bf16.gmra.mxu0 %v733
      %v1245 = vpop.f32.mrf.mxu0
      %v1246 = vadd.f32 %v781, %v1245
      %v1247 = vpop.f32.mrf.mxu0
      %v1248 = vadd.f32 %v785, %v1247
      %v1249 = vpop.f32.mrf.mxu0
      %v1250 = vadd.f32 %v781, %v1249
      %v1251 = vpop.f32.mrf.mxu0
      %v1252 = vadd.f32 %v785, %v1251
      %1253 = vmatprep.mubr.bf16.mxu0 0
      %1254 = vmatmul.mubr.bf16.gmra.mxu0 %v734
      %v1255 = vpop.f32.mrf.mxu0
      %v1256 = vadd.f32 %v781, %v1255
      %v1257 = vpop.f32.mrf.mxu0
      %v1258 = vadd.f32 %v785, %v1257
      %v1259 = vpop.f32.mrf.mxu0
      %v1260 = vadd.f32 %v781, %v1259
      %v1261 = vpop.f32.mrf.mxu0
      %v1262 = vadd.f32 %v785, %v1261
      %1263 = vmatprep.mubr.bf16.mxu0 0
      %1264 = vmatmul.mubr.bf16.gmra.mxu0 %v735
      %v1265 = vpop.f32.mrf.mxu0
      %v1266 = vadd.f32 %v781, %v1265
      %v1267 = vpop.f32.mrf.mxu0
      %v1268 = vadd.f32 %v785, %v1267
      %v1269 = vpop.f32.mrf.mxu0
      %v1270 = vpop.f32.mrf.mxu0
      %1271 = vdwg.mxu0
      %v1272 = vmul.f32 %v985, 0.5
      %v1273 = vmul.f32 %v987, 0.5
      %v1274 = vmul.f32 %v1146, 0.5
      %v1275 = vmul.f32 %v1148, 0.5
      %v1276 = vmul.f32 %v989, 0.5
      %v1277 = vmul.f32 %v991, 0.5
      %v1278 = vmul.f32 %v1150, 0.5
      %v1279 = vmul.f32 %v1152, 0.5
      %v1280 = vmul.f32 %v995, 0.5
      %v1281 = vmul.f32 %v997, 0.5
      %v1282 = vmul.f32 %v1156, 0.5
      %v1283 = vmul.f32 %v1158, 0.5
      %v1284 = vmul.f32 %v999, 0.5
      %v1285 = vmul.f32 %v1001, 0.5
      %v1286 = vmul.f32 %v1160, 0.5
      %v1287 = vmul.f32 %v1162, 0.5
      %v1288 = vmul.f32 %v1005, 0.5
      %v1289 = vmul.f32 %v1007, 0.5
      %v1290 = vmul.f32 %v1166, 0.5
      %v1291 = vmul.f32 %v1168, 0.5
      %v1292 = vmul.f32 %v1009, 0.5
      %v1293 = vmul.f32 %v1011, 0.5
      %v1294 = vmul.f32 %v1170, 0.5
      %v1295 = vmul.f32 %v1172, 0.5
      %v1296 = vmul.f32 %v1015, 0.5
      %v1297 = vmul.f32 %v1017, 0.5
      %v1298 = vmul.f32 %v1176, 0.5
      %v1299 = vmul.f32 %v1178, 0.5
      %v1300 = vmul.f32 %v1019, 0.5
      %v1301 = vmul.f32 %v1021, 0.5
      %v1302 = vmul.f32 %v1180, 0.5
      %v1303 = vmul.f32 %v1182, 0.5
      %v1304 = vmul.f32 %v1025, 0.5
      %v1305 = vmul.f32 %v1027, 0.5
      %v1306 = vmul.f32 %v1186, 0.5
      %v1307 = vmul.f32 %v1188, 0.5
      %v1308 = vmul.f32 %v1029, 0.5
      %v1309 = vmul.f32 %v1031, 0.5
      %v1310 = vmul.f32 %v1190, 0.5
      %v1311 = vmul.f32 %v1192, 0.5
      %v1312 = vmul.f32 %v1035, 0.5
      %v1313 = vmul.f32 %v1037, 0.5
      %v1314 = vmul.f32 %v1196, 0.5
      %v1315 = vmul.f32 %v1198, 0.5
      %v1316 = vmul.f32 %v1039, 0.5
      %v1317 = vmul.f32 %v1041, 0.5
      %v1318 = vmul.f32 %v1200, 0.5
      %v1319 = vmul.f32 %v1202, 0.5
      %v1320 = vmul.f32 %v1045, 0.5
      %v1321 = vmul.f32 %v1047, 0.5
      %v1322 = vmul.f32 %v1206, 0.5
      %v1323 = vmul.f32 %v1208, 0.5
      %v1324 = vmul.f32 %v1049, 0.5
      %v1325 = vmul.f32 %v1051, 0.5
      %v1326 = vmul.f32 %v1210, 0.5
      %v1327 = vmul.f32 %v1212, 0.5
      %v1328 = vmul.f32 %v1055, 0.5
      %v1329 = vmul.f32 %v1057, 0.5
      %v1330 = vmul.f32 %v1216, 0.5
      %v1331 = vmul.f32 %v1218, 0.5
      %v1332 = vmul.f32 %v1059, 0.5
      %v1333 = vmul.f32 %v1061, 0.5
      %v1334 = vmul.f32 %v1220, 0.5
      %v1335 = vmul.f32 %v1222, 0.5
      %v1336 = vmul.f32 %v1065, 0.5
      %v1337 = vmul.f32 %v1067, 0.5
      %v1338 = vmul.f32 %v1226, 0.5
      %v1339 = vmul.f32 %v1228, 0.5
      %v1340 = vmul.f32 %v1069, 0.5
      %v1341 = vmul.f32 %v1071, 0.5
      %v1342 = vmul.f32 %v1230, 0.5
      %v1343 = vmul.f32 %v1232, 0.5
      %v1344 = vmul.f32 %v1075, 0.5
      %v1345 = vmul.f32 %v1077, 0.5
      %v1346 = vmul.f32 %v1236, 0.5
      %v1347 = vmul.f32 %v1238, 0.5
      %v1348 = vmul.f32 %v1079, 0.5
      %v1349 = vmul.f32 %v1081, 0.5
      %v1350 = vmul.f32 %v1240, 0.5
      %v1351 = vmul.f32 %v1242, 0.5
      %v1352 = vmul.f32 %v1085, 0.5
      %v1353 = vmul.f32 %v1087, 0.5
      %v1354 = vmul.f32 %v1246, 0.5
      %v1355 = vmul.f32 %v1248, 0.5
      %v1356 = vmul.f32 %v1089, 0.5
      %v1357 = vmul.f32 %v1091, 0.5
      %v1358 = vmul.f32 %v1250, 0.5
      %v1359 = vmul.f32 %v1252, 0.5
      %v1360 = vmul.f32 %v1095, 0.5
      %v1361 = vmul.f32 %v1097, 0.5
      %v1362 = vmul.f32 %v1256, 0.5
      %v1363 = vmul.f32 %v1258, 0.5
      %v1364 = vmul.f32 %v1099, 0.5
      %v1365 = vmul.f32 %v1101, 0.5
      %v1366 = vmul.f32 %v1260, 0.5
      %v1367 = vmul.f32 %v1262, 0.5
      %v1368 = vmul.f32 %v1105, 0.5
      %v1369 = vmul.f32 %v1107, 0.5
      %v1370 = vmul.f32 %v1266, 0.5
      %v1371 = vmul.f32 %v1268, 0.5
      %v1372 = vmul.f32 %v985, 0.70710677
      %v1373 = vmul.f32 %v987, 0.70710677
      %v1374 = vmul.f32 %v1146, 0.70710677
      %v1375 = vmul.f32 %v1148, 0.70710677
      %v1376 = vmul.f32 %v989, 0.70710677
      %v1377 = vmul.f32 %v991, 0.70710677
      %v1378 = vmul.f32 %v1150, 0.70710677
      %v1379 = vmul.f32 %v1152, 0.70710677
      %v1380 = vmul.f32 %v995, 0.70710677
      %v1381 = vmul.f32 %v997, 0.70710677
      %v1382 = vmul.f32 %v1156, 0.70710677
      %v1383 = vmul.f32 %v1158, 0.70710677
      %v1384 = vmul.f32 %v999, 0.70710677
      %v1385 = vmul.f32 %v1001, 0.70710677
      %v1386 = vmul.f32 %v1160, 0.70710677
      %v1387 = vmul.f32 %v1162, 0.70710677
      %v1388 = vmul.f32 %v1005, 0.70710677
      %v1389 = vmul.f32 %v1007, 0.70710677
      %v1390 = vmul.f32 %v1166, 0.70710677
      %v1391 = vmul.f32 %v1168, 0.70710677
      %v1392 = vmul.f32 %v1009, 0.70710677
      %v1393 = vmul.f32 %v1011, 0.70710677
      %v1394 = vmul.f32 %v1170, 0.70710677
      %v1395 = vmul.f32 %v1172, 0.70710677
      %v1396 = vmul.f32 %v1015, 0.70710677
      %v1397 = vmul.f32 %v1017, 0.70710677
      %v1398 = vmul.f32 %v1176, 0.70710677
      %v1399 = vmul.f32 %v1178, 0.70710677
      %v1400 = vmul.f32 %v1019, 0.70710677
      %v1401 = vmul.f32 %v1021, 0.70710677
      %v1402 = vmul.f32 %v1180, 0.70710677
      %v1403 = vmul.f32 %v1182, 0.70710677
      %v1404 = vmul.f32 %v1025, 0.70710677
      %v1405 = vmul.f32 %v1027, 0.70710677
      %v1406 = vmul.f32 %v1186, 0.70710677
      %v1407 = vmul.f32 %v1188, 0.70710677
      %v1408 = vmul.f32 %v1029, 0.70710677
      %v1409 = vmul.f32 %v1031, 0.70710677
      %v1410 = vmul.f32 %v1190, 0.70710677
      %v1411 = vmul.f32 %v1192, 0.70710677
      %v1412 = vmul.f32 %v1035, 0.70710677
      %v1413 = vmul.f32 %v1037, 0.70710677
      %v1414 = vmul.f32 %v1196, 0.70710677
      %v1415 = vmul.f32 %v1198, 0.70710677
      %v1416 = vmul.f32 %v1039, 0.70710677
      %v1417 = vmul.f32 %v1041, 0.70710677
      %v1418 = vmul.f32 %v1200, 0.70710677
      %v1419 = vmul.f32 %v1202, 0.70710677
      %v1420 = vmul.f32 %v1045, 0.70710677
      %v1421 = vmul.f32 %v1047, 0.70710677
      %v1422 = vmul.f32 %v1206, 0.70710677
      %v1423 = vmul.f32 %v1208, 0.70710677
      %v1424 = vmul.f32 %v1049, 0.70710677
      %v1425 = vmul.f32 %v1051, 0.70710677
      %v1426 = vmul.f32 %v1210, 0.70710677
      %v1427 = vmul.f32 %v1212, 0.70710677
      %v1428 = vmul.f32 %v1055, 0.70710677
      %v1429 = vmul.f32 %v1057, 0.70710677
      %v1430 = vmul.f32 %v1216, 0.70710677
      %v1431 = vmul.f32 %v1218, 0.70710677
      %v1432 = vmul.f32 %v1059, 0.70710677
      %v1433 = vmul.f32 %v1061, 0.70710677
      %v1434 = vmul.f32 %v1220, 0.70710677
      %v1435 = vmul.f32 %v1222, 0.70710677
      %v1436 = vmul.f32 %v1065, 0.70710677
      %v1437 = vmul.f32 %v1067, 0.70710677
      %v1438 = vmul.f32 %v1226, 0.70710677
      %v1439 = vmul.f32 %v1228, 0.70710677
      %v1440 = vmul.f32 %v1069, 0.70710677
      %v1441 = vmul.f32 %v1071, 0.70710677
      %v1442 = vmul.f32 %v1230, 0.70710677
      %v1443 = vmul.f32 %v1232, 0.70710677
      %v1444 = vmul.f32 %v1075, 0.70710677
      %v1445 = vmul.f32 %v1077, 0.70710677
      %v1446 = vmul.f32 %v1236, 0.70710677
      %v1447 = vmul.f32 %v1238, 0.70710677
      %v1448 = vmul.f32 %v1079, 0.70710677
      %v1449 = vmul.f32 %v1081, 0.70710677
      %v1450 = vmul.f32 %v1240, 0.70710677
      %v1451 = vmul.f32 %v1242, 0.70710677
      %v1452 = vmul.f32 %v1085, 0.70710677
      %v1453 = vmul.f32 %v1087, 0.70710677
      %v1454 = vmul.f32 %v1246, 0.70710677
      %v1455 = vmul.f32 %v1248, 0.70710677
      %v1456 = vmul.f32 %v1089, 0.70710677
      %v1457 = vmul.f32 %v1091, 0.70710677
      %v1458 = vmul.f32 %v1250, 0.70710677
      %v1459 = vmul.f32 %v1252, 0.70710677
      %v1460 = vmul.f32 %v1095, 0.70710677
      %v1461 = vmul.f32 %v1097, 0.70710677
      %v1462 = vmul.f32 %v1256, 0.70710677
      %v1463 = vmul.f32 %v1258, 0.70710677
      %v1464 = vmul.f32 %v1099, 0.70710677
      %v1465 = vmul.f32 %v1101, 0.70710677
      %v1466 = vmul.f32 %v1260, 0.70710677
      %v1467 = vmul.f32 %v1262, 0.70710677
      %v1468 = vmul.f32 %v1105, 0.70710677
      %v1469 = vmul.f32 %v1107, 0.70710677
      %v1470 = vmul.f32 %v1266, 0.70710677
      %v1471 = vmul.f32 %v1268, 0.70710677
      %v1472 = verf.f32.pop %v1372
      %v1473 = verf.f32.pop %v1373
      %v1474 = verf.f32.pop %v1374
      %v1475 = verf.f32.pop %v1375
      %v1476 = verf.f32.pop %v1376
      %v1477 = verf.f32.pop %v1377
      %v1478 = verf.f32.pop %v1378
      %v1479 = verf.f32.pop %v1379
      %v1480 = verf.f32.pop %v1380
      %v1481 = verf.f32.pop %v1381
      %v1482 = verf.f32.pop %v1382
      %v1483 = verf.f32.pop %v1383
      %v1484 = verf.f32.pop %v1384
      %v1485 = verf.f32.pop %v1385
      %v1486 = verf.f32.pop %v1386
      %v1487 = verf.f32.pop %v1387
      %v1488 = verf.f32.pop %v1388
      %v1489 = verf.f32.pop %v1389
      %v1490 = verf.f32.pop %v1390
      %v1491 = verf.f32.pop %v1391
      %v1492 = verf.f32.pop %v1392
      %v1493 = verf.f32.pop %v1393
      %v1494 = verf.f32.pop %v1394
      %v1495 = verf.f32.pop %v1395
      %v1496 = verf.f32.pop %v1396
      %v1497 = verf.f32.pop %v1397
      %v1498 = verf.f32.pop %v1398
      %v1499 = verf.f32.pop %v1399
      %v1500 = verf.f32.pop %v1400
      %v1501 = verf.f32.pop %v1401
      %v1502 = verf.f32.pop %v1402
      %v1503 = verf.f32.pop %v1403
      %v1504 = verf.f32.pop %v1404
      %v1505 = verf.f32.pop %v1405
      %v1506 = verf.f32.pop %v1406
      %v1507 = verf.f32.pop %v1407
      %v1508 = verf.f32.pop %v1408
      %v1509 = verf.f32.pop %v1409
      %v1510 = verf.f32.pop %v1410
      %v1511 = verf.f32.pop %v1411
      %v1512 = verf.f32.pop %v1412
      %v1513 = verf.f32.pop %v1413
      %v1514 = verf.f32.pop %v1414
      %v1515 = verf.f32.pop %v1415
      %v1516 = verf.f32.pop %v1416
      %v1517 = verf.f32.pop %v1417
      %v1518 = verf.f32.pop %v1418
      %v1519 = verf.f32.pop %v1419
      %v1520 = verf.f32.pop %v1420
      %v1521 = verf.f32.pop %v1421
      %v1522 = verf.f32.pop %v1422
      %v1523 = verf.f32.pop %v1423
      %v1524 = verf.f32.pop %v1424
      %v1525 = verf.f32.pop %v1425
      %v1526 = verf.f32.pop %v1426
      %v1527 = verf.f32.pop %v1427
      %v1528 = verf.f32.pop %v1428
      %v1529 = verf.f32.pop %v1429
      %v1530 = verf.f32.pop %v1430
      %v1531 = verf.f32.pop %v1431
      %v1532 = verf.f32.pop %v1432
      %v1533 = verf.f32.pop %v1433
      %v1534 = verf.f32.pop %v1434
      %v1535 = verf.f32.pop %v1435
      %v1536 = verf.f32.pop %v1436
      %v1537 = verf.f32.pop %v1437
      %v1538 = verf.f32.pop %v1438
      %v1539 = verf.f32.pop %v1439
      %v1540 = verf.f32.pop %v1440
      %v1541 = verf.f32.pop %v1441
      %v1542 = verf.f32.pop %v1442
      %v1543 = verf.f32.pop %v1443
      %v1544 = verf.f32.pop %v1444
      %v1545 = verf.f32.pop %v1445
      %v1546 = verf.f32.pop %v1446
      %v1547 = verf.f32.pop %v1447
      %v1548 = verf.f32.pop %v1448
      %v1549 = verf.f32.pop %v1449
      %v1550 = verf.f32.pop %v1450
      %v1551 = verf.f32.pop %v1451
      %v1552 = verf.f32.pop %v1452
      %v1553 = verf.f32.pop %v1453
      %v1554 = verf.f32.pop %v1454
      %v1555 = verf.f32.pop %v1455
      %v1556 = verf.f32.pop %v1456
      %v1557 = verf.f32.pop %v1457
      %v1558 = verf.f32.pop %v1458
      %v1559 = verf.f32.pop %v1459
      %v1560 = verf.f32.pop %v1460
      %v1561 = verf.f32.pop %v1461
      %v1562 = verf.f32.pop %v1462
      %v1563 = verf.f32.pop %v1463
      %v1564 = verf.f32.pop %v1464
      %v1565 = verf.f32.pop %v1465
      %v1566 = verf.f32.pop %v1466
      %v1567 = verf.f32.pop %v1467
      %v1568 = verf.f32.pop %v1468
      %v1569 = verf.f32.pop %v1469
      %v1570 = verf.f32.pop %v1470
      %v1571 = verf.f32.pop %v1471
      %v1572 = vadd.f32 %v1472, 1.0
      %v1573 = vadd.f32 %v1473, 1.0
      %v1574 = vadd.f32 %v1474, 1.0
      %v1575 = vadd.f32 %v1475, 1.0
      %v1576 = vadd.f32 %v1476, 1.0
      %v1577 = vadd.f32 %v1477, 1.0
      %v1578 = vadd.f32 %v1478, 1.0
      %v1579 = vadd.f32 %v1479, 1.0
      %v1580 = vadd.f32 %v1480, 1.0
      %v1581 = vadd.f32 %v1481, 1.0
      %v1582 = vadd.f32 %v1482, 1.0
      %v1583 = vadd.f32 %v1483, 1.0
      %v1584 = vadd.f32 %v1484, 1.0
      %v1585 = vadd.f32 %v1485, 1.0
      %v1586 = vadd.f32 %v1486, 1.0
      %v1587 = vadd.f32 %v1487, 1.0
      %v1588 = vadd.f32 %v1488, 1.0
      %v1589 = vadd.f32 %v1489, 1.0
      %v1590 = vadd.f32 %v1490, 1.0
      %v1591 = vadd.f32 %v1491, 1.0
      %v1592 = vadd.f32 %v1492, 1.0
      %v1593 = vadd.f32 %v1493, 1.0
      %v1594 = vadd.f32 %v1494, 1.0
      %v1595 = vadd.f32 %v1495, 1.0
      %v1596 = vadd.f32 %v1496, 1.0
      %v1597 = vadd.f32 %v1497, 1.0
      %v1598 = vadd.f32 %v1498, 1.0
      %v1599 = vadd.f32 %v1499, 1.0
      %v1600 = vadd.f32 %v1500, 1.0
      %v1601 = vadd.f32 %v1501, 1.0
      %v1602 = vadd.f32 %v1502, 1.0
      %v1603 = vadd.f32 %v1503, 1.0
      %v1604 = vadd.f32 %v1504, 1.0
      %v1605 = vadd.f32 %v1505, 1.0
      %v1606 = vadd.f32 %v1506, 1.0
      %v1607 = vadd.f32 %v1507, 1.0
      %v1608 = vadd.f32 %v1508, 1.0
      %v1609 = vadd.f32 %v1509, 1.0
      %v1610 = vadd.f32 %v1510, 1.0
      %v1611 = vadd.f32 %v1511, 1.0
      %v1612 = vadd.f32 %v1512, 1.0
      %v1613 = vadd.f32 %v1513, 1.0
      %v1614 = vadd.f32 %v1514, 1.0
      %v1615 = vadd.f32 %v1515, 1.0
      %v1616 = vadd.f32 %v1516, 1.0
      %v1617 = vadd.f32 %v1517, 1.0
      %v1618 = vadd.f32 %v1518, 1.0
      %v1619 = vadd.f32 %v1519, 1.0
      %v1620 = vadd.f32 %v1520, 1.0
      %v1621 = vadd.f32 %v1521, 1.0
      %v1622 = vadd.f32 %v1522, 1.0
      %v1623 = vadd.f32 %v1523, 1.0
      %v1624 = vadd.f32 %v1524, 1.0
      %v1625 = vadd.f32 %v1525, 1.0
      %v1626 = vadd.f32 %v1526, 1.0
      %v1627 = vadd.f32 %v1527, 1.0
      %v1628 = vadd.f32 %v1528, 1.0
      %v1629 = vadd.f32 %v1529, 1.0
      %v1630 = vadd.f32 %v1530, 1.0
      %v1631 = vadd.f32 %v1531, 1.0
      %v1632 = vadd.f32 %v1532, 1.0
      %v1633 = vadd.f32 %v1533, 1.0
      %v1634 = vadd.f32 %v1534, 1.0
      %v1635 = vadd.f32 %v1535, 1.0
      %v1636 = vadd.f32 %v1536, 1.0
      %v1637 = vadd.f32 %v1537, 1.0
      %v1638 = vadd.f32 %v1538, 1.0
      %v1639 = vadd.f32 %v1539, 1.0
      %v1640 = vadd.f32 %v1540, 1.0
      %v1641 = vadd.f32 %v1541, 1.0
      %v1642 = vadd.f32 %v1542, 1.0
      %v1643 = vadd.f32 %v1543, 1.0
      %v1644 = vadd.f32 %v1544, 1.0
      %v1645 = vadd.f32 %v1545, 1.0
      %v1646 = vadd.f32 %v1546, 1.0
      %v1647 = vadd.f32 %v1547, 1.0
      %v1648 = vadd.f32 %v1548, 1.0
      %v1649 = vadd.f32 %v1549, 1.0
      %v1650 = vadd.f32 %v1550, 1.0
      %v1651 = vadd.f32 %v1551, 1.0
      %v1652 = vadd.f32 %v1552, 1.0
      %v1653 = vadd.f32 %v1553, 1.0
      %v1654 = vadd.f32 %v1554, 1.0
      %v1655 = vadd.f32 %v1555, 1.0
      %v1656 = vadd.f32 %v1556, 1.0
      %v1657 = vadd.f32 %v1557, 1.0
      %v1658 = vadd.f32 %v1558, 1.0
      %v1659 = vadd.f32 %v1559, 1.0
      %v1660 = vadd.f32 %v1560, 1.0
      %v1661 = vadd.f32 %v1561, 1.0
      %v1662 = vadd.f32 %v1562, 1.0
      %v1663 = vadd.f32 %v1563, 1.0
      %v1664 = vadd.f32 %v1564, 1.0
      %v1665 = vadd.f32 %v1565, 1.0
      %v1666 = vadd.f32 %v1566, 1.0
      %v1667 = vadd.f32 %v1567, 1.0
      %v1668 = vadd.f32 %v1568, 1.0
      %v1669 = vadd.f32 %v1569, 1.0
      %v1670 = vadd.f32 %v1570, 1.0
      %v1671 = vadd.f32 %v1571, 1.0
      %v1672 = vmul.f32 %v1272, %v1572
      %v1673 = vmul.f32 %v1273, %v1573
      %v1674 = vmul.f32 %v1274, %v1574
      %v1675 = vmul.f32 %v1275, %v1575
      %v1676 = vmul.f32 %v1276, %v1576
      %v1677 = vmul.f32 %v1277, %v1577
      %v1678 = vmul.f32 %v1278, %v1578
      %v1679 = vmul.f32 %v1279, %v1579
      %v1680 = vmul.f32 %v1280, %v1580
      %v1681 = vmul.f32 %v1281, %v1581
      %v1682 = vmul.f32 %v1282, %v1582
      %v1683 = vmul.f32 %v1283, %v1583
      %v1684 = vmul.f32 %v1284, %v1584
      %v1685 = vmul.f32 %v1285, %v1585
      %v1686 = vmul.f32 %v1286, %v1586
      %v1687 = vmul.f32 %v1287, %v1587
      %v1688 = vmul.f32 %v1288, %v1588
      %v1689 = vmul.f32 %v1289, %v1589
      %v1690 = vmul.f32 %v1290, %v1590
      %v1691 = vmul.f32 %v1291, %v1591
      %v1692 = vmul.f32 %v1292, %v1592
      %v1693 = vmul.f32 %v1293, %v1593
      %v1694 = vmul.f32 %v1294, %v1594
      %v1695 = vmul.f32 %v1295, %v1595
      %v1696 = vmul.f32 %v1296, %v1596
      %v1697 = vmul.f32 %v1297, %v1597
      %v1698 = vmul.f32 %v1298, %v1598
      %v1699 = vmul.f32 %v1299, %v1599
      %v1700 = vmul.f32 %v1300, %v1600
      %v1701 = vmul.f32 %v1301, %v1601
      %v1702 = vmul.f32 %v1302, %v1602
      %v1703 = vmul.f32 %v1303, %v1603
      %v1704 = vmul.f32 %v1304, %v1604
      %v1705 = vmul.f32 %v1305, %v1605
      %v1706 = vmul.f32 %v1306, %v1606
      %v1707 = vmul.f32 %v1307, %v1607
      %v1708 = vmul.f32 %v1308, %v1608
      %v1709 = vmul.f32 %v1309, %v1609
      %v1710 = vmul.f32 %v1310, %v1610
      %v1711 = vmul.f32 %v1311, %v1611
      %v1712 = vmul.f32 %v1312, %v1612
      %v1713 = vmul.f32 %v1313, %v1613
      %v1714 = vmul.f32 %v1314, %v1614
      %v1715 = vmul.f32 %v1315, %v1615
      %v1716 = vmul.f32 %v1316, %v1616
      %v1717 = vmul.f32 %v1317, %v1617
      %v1718 = vmul.f32 %v1318, %v1618
      %v1719 = vmul.f32 %v1319, %v1619
      %v1720 = vmul.f32 %v1320, %v1620
      %v1721 = vmul.f32 %v1321, %v1621
      %v1722 = vmul.f32 %v1322, %v1622
      %v1723 = vmul.f32 %v1323, %v1623
      %v1724 = vmul.f32 %v1324, %v1624
      %v1725 = vmul.f32 %v1325, %v1625
      %v1726 = vmul.f32 %v1326, %v1626
      %v1727 = vmul.f32 %v1327, %v1627
      %v1728 = vmul.f32 %v1328, %v1628
      %v1729 = vmul.f32 %v1329, %v1629
      %v1730 = vmul.f32 %v1330, %v1630
      %v1731 = vmul.f32 %v1331, %v1631
      %v1732 = vmul.f32 %v1332, %v1632
      %v1733 = vmul.f32 %v1333, %v1633
      %v1734 = vmul.f32 %v1334, %v1634
      %v1735 = vmul.f32 %v1335, %v1635
      %v1736 = vmul.f32 %v1336, %v1636
      %v1737 = vmul.f32 %v1337, %v1637
      %v1738 = vmul.f32 %v1338, %v1638
      %v1739 = vmul.f32 %v1339, %v1639
      %v1740 = vmul.f32 %v1340, %v1640
      %v1741 = vmul.f32 %v1341, %v1641
      %v1742 = vmul.f32 %v1342, %v1642
      %v1743 = vmul.f32 %v1343, %v1643
      %v1744 = vmul.f32 %v1344, %v1644
      %v1745 = vmul.f32 %v1345, %v1645
      %v1746 = vmul.f32 %v1346, %v1646
      %v1747 = vmul.f32 %v1347, %v1647
      %v1748 = vmul.f32 %v1348, %v1648
      %v1749 = vmul.f32 %v1349, %v1649
      %v1750 = vmul.f32 %v1350, %v1650
      %v1751 = vmul.f32 %v1351, %v1651
      %v1752 = vmul.f32 %v1352, %v1652
      %v1753 = vmul.f32 %v1353, %v1653
      %v1754 = vmul.f32 %v1354, %v1654
      %v1755 = vmul.f32 %v1355, %v1655
      %v1756 = vmul.f32 %v1356, %v1656
      %v1757 = vmul.f32 %v1357, %v1657
      %v1758 = vmul.f32 %v1358, %v1658
      %v1759 = vmul.f32 %v1359, %v1659
      %v1760 = vmul.f32 %v1360, %v1660
      %v1761 = vmul.f32 %v1361, %v1661
      %v1762 = vmul.f32 %v1362, %v1662
      %v1763 = vmul.f32 %v1363, %v1663
      %v1764 = vmul.f32 %v1364, %v1664
      %v1765 = vmul.f32 %v1365, %v1665
      %v1766 = vmul.f32 %v1366, %v1666
      %v1767 = vmul.f32 %v1367, %v1667
      %v1768 = vmul.f32 %v1368, %v1668
      %v1769 = vmul.f32 %v1369, %v1669
      %v1770 = vmul.f32 %v1370, %v1670
      %v1771 = vmul.f32 %v1371, %v1671
      %v1772 = vpack.c.bf16 %v1676, %v1672
      %v1773 = vpack.c.bf16 %v1677, %v1673
      %v1774 = vpack.c.bf16 %v1678, %v1674
      %v1775 = vpack.c.bf16 %v1679, %v1675
      %v1776 = vpack.c.bf16 %v1684, %v1680
      %v1777 = vpack.c.bf16 %v1685, %v1681
      %v1778 = vpack.c.bf16 %v1686, %v1682
      %v1779 = vpack.c.bf16 %v1687, %v1683
      %v1780 = vpack.c.bf16 %v1692, %v1688
      %v1781 = vpack.c.bf16 %v1693, %v1689
      %v1782 = vpack.c.bf16 %v1694, %v1690
      %v1783 = vpack.c.bf16 %v1695, %v1691
      %v1784 = vpack.c.bf16 %v1700, %v1696
      %v1785 = vpack.c.bf16 %v1701, %v1697
      %v1786 = vpack.c.bf16 %v1702, %v1698
      %v1787 = vpack.c.bf16 %v1703, %v1699
      %v1788 = vpack.c.bf16 %v1708, %v1704
      %v1789 = vpack.c.bf16 %v1709, %v1705
      %v1790 = vpack.c.bf16 %v1710, %v1706
      %v1791 = vpack.c.bf16 %v1711, %v1707
      %v1792 = vpack.c.bf16 %v1716, %v1712
      %v1793 = vpack.c.bf16 %v1717, %v1713
      %v1794 = vpack.c.bf16 %v1718, %v1714
      %v1795 = vpack.c.bf16 %v1719, %v1715
      %v1796 = vpack.c.bf16 %v1724, %v1720
      %v1797 = vpack.c.bf16 %v1725, %v1721
      %v1798 = vpack.c.bf16 %v1726, %v1722
      %v1799 = vpack.c.bf16 %v1727, %v1723
      %v1800 = vpack.c.bf16 %v1732, %v1728
      %v1801 = vpack.c.bf16 %v1733, %v1729
      %v1802 = vpack.c.bf16 %v1734, %v1730
      %v1803 = vpack.c.bf16 %v1735, %v1731
      %v1804 = vpack.c.bf16 %v1740, %v1736
      %v1805 = vpack.c.bf16 %v1741, %v1737
      %v1806 = vpack.c.bf16 %v1742, %v1738
      %v1807 = vpack.c.bf16 %v1743, %v1739
      %v1808 = vpack.c.bf16 %v1748, %v1744
      %v1809 = vpack.c.bf16 %v1749, %v1745
      %v1810 = vpack.c.bf16 %v1750, %v1746
      %v1811 = vpack.c.bf16 %v1751, %v1747
      %v1812 = vpack.c.bf16 %v1756, %v1752
      %v1813 = vpack.c.bf16 %v1757, %v1753
      %v1814 = vpack.c.bf16 %v1758, %v1754
      %v1815 = vpack.c.bf16 %v1759, %v1755
      %v1816 = vpack.c.bf16 %v1764, %v1760
      %v1817 = vpack.c.bf16 %v1765, %v1761
      %v1818 = vpack.c.bf16 %v1766, %v1762
      %v1819 = vpack.c.bf16 %v1767, %v1763
      %v1820 = vpack.c.bf16 %v1768, %v1768
      %v1821 = vpack.c.bf16 %v1769, %v1769
      %v1822 = vpack.c.bf16 %v1770, %v1770
      %v1823 = vpack.c.bf16 %v1771, %v1771
      %v1824 = vld [vmem:[%s5] sm:$0xf]
      %v1825 = vld [vmem:[%s5 + $0x4] sm:$0xf]
      %v1826 = vld [vmem:[%s5 + $0x8] sm:$0xf]
      %v1827 = vld [vmem:[%s5 + $0xc] sm:$0xf]
      %v1828 = vld [vmem:[%s5 + $0x10] sm:$0xf]
      %v1829 = vld [vmem:[%s5 + $0x14] sm:$0xf]
      %v1830 = vld [vmem:[%s5 + $0x18] sm:$0xf]
      %v1831 = vld [vmem:[%s5 + $0x1c] sm:$0xf]
      %v1832 = vld [vmem:[%s5 + $0x20] sm:$0xf]
      %v1833 = vld [vmem:[%s5 + $0x24] sm:$0xf]
      %v1834 = vld [vmem:[%s5 + $0x28] sm:$0xf]
      %v1835 = vld [vmem:[%s5 + $0x2c] sm:$0xf]
      %v1836 = vld [vmem:[%s5 + $0x30] sm:$0xf]
      %v1837 = vld [vmem:[%s5 + $0x34] sm:$0xf]
      %v1838 = vld [vmem:[%s5 + $0x38] sm:$0xf]
      %v1839 = vld [vmem:[%s5 + $0x3c] sm:$0xf]
      %v1840 = vld [vmem:[%s5 + $0x40] sm:$0xf]
      %v1841 = vld [vmem:[%s5 + $0x44] sm:$0xf]
      %v1842 = vld [vmem:[%s5 + $0x48] sm:$0xf]
      %v1843 = vld [vmem:[%s5 + $0x4c] sm:$0xf]
      %v1844 = vld [vmem:[%s5 + $0x50] sm:$0xf]
      %v1845 = vld [vmem:[%s5 + $0x54] sm:$0xf]
      %v1846 = vld [vmem:[%s5 + $0x58] sm:$0xf]
      %v1847 = vld [vmem:[%s5 + $0x5c] sm:$0xf]
      %v1848 = vld [vmem:[%s5 + $0x60] sm:$0xf]
      %v1849 = vld [vmem:[%s5 + $0x64] sm:$0xf]
      %v1850 = vld [vmem:[%s5 + $0x68] sm:$0xf]
      %v1851 = vld [vmem:[%s5 + $0x6c] sm:$0xf]
      %v1852 = vld [vmem:[%s5 + $0x70] sm:$0xf]
      %v1853 = vld [vmem:[%s5 + $0x74] sm:$0xf]
      %v1854 = vld [vmem:[%s5 + $0x78] sm:$0xf]
      %v1855 = vld [vmem:[%s5 + $0x7c] sm:$0xf]
      %v1856 = vld [vmem:[%s5 + $0x80] sm:$0xf]
      %v1857 = vld [vmem:[%s5 + $0x84] sm:$0xf]
      %v1858 = vld [vmem:[%s5 + $0x88] sm:$0xf]
      %v1859 = vld [vmem:[%s5 + $0x8c] sm:$0xf]
      %v1860 = vld [vmem:[%s5 + $0x90] sm:$0xf]
      %v1861 = vld [vmem:[%s5 + $0x94] sm:$0xf]
      %v1862 = vld [vmem:[%s5 + $0x98] sm:$0xf]
      %v1863 = vld [vmem:[%s5 + $0x9c] sm:$0xf]
      %v1864 = vld [vmem:[%s5 + $0xa0] sm:$0xf]
      %v1865 = vld [vmem:[%s5 + $0xa4] sm:$0xf]
      %v1866 = vld [vmem:[%s5 + $0xa8] sm:$0xf]
      %v1867 = vld [vmem:[%s5 + $0xac] sm:$0xf]
      %v1868 = vld [vmem:[%s5 + $0xb0] sm:$0xf]
      %v1869 = vld [vmem:[%s5 + $0xb4] sm:$0xf]
      %v1870 = vld [vmem:[%s5 + $0xb8] sm:$0xf]
      %v1871 = vld [vmem:[%s5 + $0xbc] sm:$0xf]
      %v1872 = vld [vmem:[%s5 + $0xc0] sm:$0xf]
      %v1873 = vld [vmem:[%s5 + $0xc4] sm:$0xf]
      %v1874 = vld [vmem:[%s5 + $0xc8] sm:$0xf]
      %v1875 = vld [vmem:[%s5 + $0xcc] sm:$0xf]
      %v1876 = vld [vmem:[%s5 + $0xd0] sm:$0xf]
      %v1877 = vld [vmem:[%s5 + $0xd4] sm:$0xf]
      %v1878 = vld [vmem:[%s5 + $0xd8] sm:$0xf]
      %v1879 = vld [vmem:[%s5 + $0xdc] sm:$0xf]
      %v1880 = vld [vmem:[%s5 + $0xe0] sm:$0xf]
      %v1881 = vld [vmem:[%s5 + $0xe4] sm:$0xf]
      %v1882 = vld [vmem:[%s5 + $0xe8] sm:$0xf]
      %v1883 = vld [vmem:[%s5 + $0xec] sm:$0xf]
      %v1884 = vld [vmem:[%s5 + $0xf0] sm:$0xf]
      %v1885 = vld [vmem:[%s5 + $0xf4] sm:$0xf]
      %v1886 = vld [vmem:[%s5 + $0xf8] sm:$0xf]
      %v1887 = vld [vmem:[%s5 + $0xfc] sm:$0xf]
      %v1888 = vld [vmem:[%s6] sm:$0x1]
      %v1890 = vlaneseq
      %v1891 = vshrl.u32 %v1890, 7
      %v1892 = vsub.s32 0, %v1891
      %v1893 = vrot.slane %v1888, %v1892
      %v1959 = vunpack.c.l.b16 %v1824
      %v1960 = vunpack.c.l.b16 %v1825
      %v1961 = vunpack.c.l.b16 %v1826
      %v1962 = vunpack.c.l.b16 %v1827
      %v1963 = vunpack.c.l.b16 %v1828
      %v1964 = vunpack.c.l.b16 %v1829
      %v1965 = vunpack.c.l.b16 %v1830
      %v1966 = vunpack.c.l.b16 %v1831
      %v1967 = vunpack.c.l.b16 %v1832
      %v1968 = vunpack.c.l.b16 %v1833
      %v1969 = vunpack.c.l.b16 %v1834
      %v1970 = vunpack.c.l.b16 %v1835
      %v1971 = vunpack.c.l.b16 %v1836
      %v1972 = vunpack.c.l.b16 %v1837
      %v1973 = vunpack.c.l.b16 %v1838
      %v1974 = vunpack.c.l.b16 %v1839
      %v1975 = vunpack.c.l.b16 %v1840
      %v1976 = vunpack.c.l.b16 %v1841
      %v1977 = vunpack.c.l.b16 %v1842
      %v1978 = vunpack.c.l.b16 %v1843
      %v1979 = vunpack.c.l.b16 %v1844
      %v1980 = vunpack.c.l.b16 %v1845
      %v1981 = vunpack.c.l.b16 %v1846
      %v1982 = vunpack.c.l.b16 %v1847
      %v1983 = vunpack.c.l.b16 %v1848
      %v1984 = vunpack.c.l.b16 %v1849
      %v1985 = vunpack.c.l.b16 %v1850
      %v1986 = vunpack.c.l.b16 %v1851
      %v1987 = vunpack.c.l.b16 %v1852
      %v1988 = vunpack.c.l.b16 %v1853
      %v1989 = vunpack.c.l.b16 %v1854
      %v1990 = vunpack.c.l.b16 %v1855
      %v1991 = vunpack.c.l.b16 %v1856
      %v1992 = vunpack.c.l.b16 %v1857
      %v1993 = vunpack.c.l.b16 %v1858
      %v1994 = vunpack.c.l.b16 %v1859
      %v1995 = vunpack.c.l.b16 %v1860
      %v1996 = vunpack.c.l.b16 %v1861
      %v1997 = vunpack.c.l.b16 %v1862
      %v1998 = vunpack.c.l.b16 %v1863
      %v1999 = vunpack.c.l.b16 %v1864
      %v2000 = vunpack.c.l.b16 %v1865
      %v2001 = vunpack.c.l.b16 %v1866
      %v2002 = vunpack.c.l.b16 %v1867
      %v2003 = vunpack.c.l.b16 %v1868
      %v2004 = vunpack.c.l.b16 %v1869
      %v2005 = vunpack.c.l.b16 %v1870
      %v2006 = vunpack.c.l.b16 %v1871
      %v2007 = vunpack.c.l.b16 %v1872
      %v2008 = vunpack.c.l.b16 %v1873
      %v2009 = vunpack.c.l.b16 %v1874
      %v2010 = vunpack.c.l.b16 %v1875
      %v2011 = vunpack.c.l.b16 %v1876
      %v2012 = vunpack.c.l.b16 %v1877
      %v2013 = vunpack.c.l.b16 %v1878
      %v2014 = vunpack.c.l.b16 %v1879
      %v2015 = vunpack.c.l.b16 %v1880
      %v2016 = vunpack.c.l.b16 %v1881
      %v2017 = vunpack.c.l.b16 %v1882
      %v2018 = vunpack.c.l.b16 %v1883
      %v2019 = vunpack.c.l.b16 %v1884
      %v2020 = vunpack.c.l.b16 %v1885
      %v2021 = vunpack.c.l.b16 %v1886
      %v2022 = vunpack.c.l.b16 %v1887
      %v2023 = vpack.c.b16 %v1960, %v1959
      %v2024 = vpack.c.b16 %v1962, %v1961
      %v2025 = vpack.c.b16 %v1964, %v1963
      %v2026 = vpack.c.b16 %v1966, %v1965
      %v2027 = vpack.c.b16 %v1968, %v1967
      %v2028 = vpack.c.b16 %v1970, %v1969
      %v2029 = vpack.c.b16 %v1972, %v1971
      %v2030 = vpack.c.b16 %v1974, %v1973
      %v2031 = vpack.c.b16 %v1976, %v1975
      %v2032 = vpack.c.b16 %v1978, %v1977
      %v2033 = vpack.c.b16 %v1980, %v1979
      %v2034 = vpack.c.b16 %v1982, %v1981
      %v2035 = vpack.c.b16 %v1984, %v1983
      %v2036 = vpack.c.b16 %v1986, %v1985
      %v2037 = vpack.c.b16 %v1988, %v1987
      %v2038 = vpack.c.b16 %v1990, %v1989
      %v2039 = vpack.c.b16 %v1992, %v1991
      %v2040 = vpack.c.b16 %v1994, %v1993
      %v2041 = vpack.c.b16 %v1996, %v1995
      %v2042 = vpack.c.b16 %v1998, %v1997
      %v2043 = vpack.c.b16 %v2000, %v1999
      %v2044 = vpack.c.b16 %v2002, %v2001
      %v2045 = vpack.c.b16 %v2004, %v2003
      %v2046 = vpack.c.b16 %v2006, %v2005
      %v2047 = vpack.c.b16 %v2008, %v2007
      %v2048 = vpack.c.b16 %v2010, %v2009
      %v2049 = vpack.c.b16 %v2012, %v2011
      %v2050 = vpack.c.b16 %v2014, %v2013
      %v2051 = vpack.c.b16 %v2016, %v2015
      %v2052 = vpack.c.b16 %v2018, %v2017
      %v2053 = vpack.c.b16 %v2020, %v2019
      %v2054 = vpack.c.b16 %v2022, %v2021
      %2087 = vmatprep.subr.bf16.mxu0 0
      %2088 = vmatpush1.bf16.msra.mxu0 %v2030
      %2089 = vmatprep.subr.bf16.mxu0 0
      %2090 = vmatpush1.bf16.msra.mxu0 %v2029
      %2091 = vmatprep.subr.bf16.mxu0 0
      %2092 = vmatpush1.bf16.msra.mxu0 %v2028
      %2093 = vmatprep.subr.bf16.mxu0 0
      %2094 = vmatpush1.bf16.msra.mxu0 %v2027
      %2095 = vmatprep.subr.bf16.mxu0 0
      %2096 = vmatpush1.bf16.msra.mxu0 %v2026
      %2097 = vmatprep.subr.bf16.mxu0 0
      %2098 = vmatpush1.bf16.msra.mxu0 %v2025
      %2099 = vmatprep.subr.bf16.mxu0 0
      %2100 = vmatpush1.bf16.msra.mxu0 %v2024
      %2101 = vmatprep.subr.bf16.mxu0 0
      %2102 = vmatpush1.bf16.msra.mxu0 %v2023
      %2103 = vmatprep.subr.bf16.mxu0 0
      %2104 = vmatpush2.bf16.msra.mxu0 %v2038
      %2105 = vmatprep.subr.bf16.mxu0 0
      %2106 = vmatpush2.bf16.msra.mxu0 %v2037
      %2107 = vmatprep.subr.bf16.mxu0 0
      %2108 = vmatpush2.bf16.msra.mxu0 %v2036
      %2109 = vmatprep.subr.bf16.mxu0 0
      %2110 = vmatpush2.bf16.msra.mxu0 %v2035
      %2111 = vmatprep.subr.bf16.mxu0 0
      %2112 = vmatpush2.bf16.msra.mxu0 %v2034
      %2113 = vmatprep.subr.bf16.mxu0 0
      %2114 = vmatpush2.bf16.msra.mxu0 %v2033
      %2115 = vmatprep.subr.bf16.mxu0 0
      %2116 = vmatpush2.bf16.msra.mxu0 %v2032
      %2117 = vmatprep.subr.bf16.mxu0 0
      %2118 = vmatpush2.bf16.msra.mxu0 %v2031
      %2119 = vmatprep.mubr.bf16.mxu0 %v1773
      %2120 = vmatmul.mubr.bf16.gmra.mxu0 %v1772
      %v2121 = vpop.f32.mrf.mxu0
      %v2122 = vadd.f32 %v1893, %v2121
      %v2123 = vpop.f32.mrf.mxu0
      %v2124 = vpop.f32.mrf.mxu0
      %v2125 = vadd.f32 %v1893, %v2124
      %v2126 = vpop.f32.mrf.mxu0
      %2127 = vmatprep.mubr.bf16.mxu0 %v1777
      %2128 = vmatmul.mubr.bf16.gmra.mxu0 %v1776
      %v2129 = vpop.f32.mrf.mxu0
      %v2130 = vadd.f32 %v1893, %v2129
      %v2131 = vpop.f32.mrf.mxu0
      %v2132 = vpop.f32.mrf.mxu0
      %v2133 = vadd.f32 %v1893, %v2132
      %v2134 = vpop.f32.mrf.mxu0
      %2135 = vmatprep.mubr.bf16.mxu0 %v1781
      %2136 = vmatmul.mubr.bf16.gmra.mxu0 %v1780
      %v2137 = vpop.f32.mrf.mxu0
      %v2138 = vadd.f32 %v1893, %v2137
      %v2139 = vpop.f32.mrf.mxu0
      %v2140 = vpop.f32.mrf.mxu0
      %v2141 = vadd.f32 %v1893, %v2140
      %v2142 = vpop.f32.mrf.mxu0
      %2143 = vmatprep.mubr.bf16.mxu0 %v1785
      %2144 = vmatmul.mubr.bf16.gmra.mxu0 %v1784
      %v2145 = vpop.f32.mrf.mxu0
      %v2146 = vadd.f32 %v1893, %v2145
      %v2147 = vpop.f32.mrf.mxu0
      %v2148 = vpop.f32.mrf.mxu0
      %v2149 = vadd.f32 %v1893, %v2148
      %v2150 = vpop.f32.mrf.mxu0
      %2151 = vmatprep.mubr.bf16.mxu0 %v1789
      %2152 = vmatmul.mubr.bf16.gmra.mxu0 %v1788
      %v2153 = vpop.f32.mrf.mxu0
      %v2154 = vadd.f32 %v1893, %v2153
      %v2155 = vpop.f32.mrf.mxu0
      %v2156 = vpop.f32.mrf.mxu0
      %v2157 = vadd.f32 %v1893, %v2156
      %v2158 = vpop.f32.mrf.mxu0
      %2159 = vmatprep.mubr.bf16.mxu0 %v1793
      %2160 = vmatmul.mubr.bf16.gmra.mxu0 %v1792
      %v2161 = vpop.f32.mrf.mxu0
      %v2162 = vadd.f32 %v1893, %v2161
      %v2163 = vpop.f32.mrf.mxu0
      %v2164 = vpop.f32.mrf.mxu0
      %v2165 = vadd.f32 %v1893, %v2164
      %v2166 = vpop.f32.mrf.mxu0
      %2167 = vmatprep.mubr.bf16.mxu0 %v1797
      %2168 = vmatmul.mubr.bf16.gmra.mxu0 %v1796
      %v2169 = vpop.f32.mrf.mxu0
      %v2170 = vadd.f32 %v1893, %v2169
      %v2171 = vpop.f32.mrf.mxu0
      %v2172 = vpop.f32.mrf.mxu0
      %v2173 = vadd.f32 %v1893, %v2172
      %v2174 = vpop.f32.mrf.mxu0
      %2175 = vmatprep.mubr.bf16.mxu0 %v1801
      %2176 = vmatmul.mubr.bf16.gmra.mxu0 %v1800
      %v2177 = vpop.f32.mrf.mxu0
      %v2178 = vadd.f32 %v1893, %v2177
      %v2179 = vpop.f32.mrf.mxu0
      %v2180 = vpop.f32.mrf.mxu0
      %v2181 = vadd.f32 %v1893, %v2180
      %v2182 = vpop.f32.mrf.mxu0
      %2183 = vmatprep.mubr.bf16.mxu0 %v1805
      %2184 = vmatmul.mubr.bf16.gmra.mxu0 %v1804
      %v2185 = vpop.f32.mrf.mxu0
      %v2186 = vadd.f32 %v1893, %v2185
      %v2187 = vpop.f32.mrf.mxu0
      %v2188 = vpop.f32.mrf.mxu0
      %v2189 = vadd.f32 %v1893, %v2188
      %v2190 = vpop.f32.mrf.mxu0
      %2191 = vmatprep.mubr.bf16.mxu0 %v1809
      %2192 = vmatmul.mubr.bf16.gmra.mxu0 %v1808
      %v2193 = vpop.f32.mrf.mxu0
      %v2194 = vadd.f32 %v1893, %v2193
      %v2195 = vpop.f32.mrf.mxu0
      %v2196 = vpop.f32.mrf.mxu0
      %v2197 = vadd.f32 %v1893, %v2196
      %v2198 = vpop.f32.mrf.mxu0
      %2199 = vmatprep.mubr.bf16.mxu0 %v1813
      %2200 = vmatmul.mubr.bf16.gmra.mxu0 %v1812
      %v2201 = vpop.f32.mrf.mxu0
      %v2202 = vadd.f32 %v1893, %v2201
      %v2203 = vpop.f32.mrf.mxu0
      %v2204 = vpop.f32.mrf.mxu0
      %v2205 = vadd.f32 %v1893, %v2204
      %v2206 = vpop.f32.mrf.mxu0
      %2207 = vmatprep.mubr.bf16.mxu0 %v1817
      %2208 = vmatmul.mubr.bf16.gmra.mxu0 %v1816
      %v2209 = vpop.f32.mrf.mxu0
      %v2210 = vadd.f32 %v1893, %v2209
      %v2211 = vpop.f32.mrf.mxu0
      %v2212 = vpop.f32.mrf.mxu0
      %v2213 = vadd.f32 %v1893, %v2212
      %v2214 = vpop.f32.mrf.mxu0
      %2215 = vmatprep.mubr.bf16.mxu0 %v1821
      %2216 = vmatmul.mubr.bf16.gmra.mxu0 %v1820
      %v2217 = vpop.f32.mrf.mxu0
      %v2218 = vadd.f32 %v1893, %v2217
      %v2219 = vpop.f32.mrf.mxu0
      %v2220 = vpop.f32.mrf.mxu0
      %v2221 = vpop.f32.mrf.mxu0
      %2222 = vdwg.mxu0
      %2223 = vmatprep.subr.bf16.mxu0 0
      %2224 = vmatpush1.bf16.msra.mxu0 %v2046
      %2225 = vmatprep.subr.bf16.mxu0 0
      %2226 = vmatpush1.bf16.msra.mxu0 %v2045
      %2227 = vmatprep.subr.bf16.mxu0 0
      %2228 = vmatpush1.bf16.msra.mxu0 %v2044
      %2229 = vmatprep.subr.bf16.mxu0 0
      %2230 = vmatpush1.bf16.msra.mxu0 %v2043
      %2231 = vmatprep.subr.bf16.mxu0 0
      %2232 = vmatpush1.bf16.msra.mxu0 %v2042
      %2233 = vmatprep.subr.bf16.mxu0 0
      %2234 = vmatpush1.bf16.msra.mxu0 %v2041
      %2235 = vmatprep.subr.bf16.mxu0 0
      %2236 = vmatpush1.bf16.msra.mxu0 %v2040
      %2237 = vmatprep.subr.bf16.mxu0 0
      %2238 = vmatpush1.bf16.msra.mxu0 %v2039
      %2239 = vmatprep.subr.bf16.mxu0 0
      %2240 = vmatpush2.bf16.msra.mxu0 %v2054
      %2241 = vmatprep.subr.bf16.mxu0 0
      %2242 = vmatpush2.bf16.msra.mxu0 %v2053
      %2243 = vmatprep.subr.bf16.mxu0 0
      %2244 = vmatpush2.bf16.msra.mxu0 %v2052
      %2245 = vmatprep.subr.bf16.mxu0 0
      %2246 = vmatpush2.bf16.msra.mxu0 %v2051
      %2247 = vmatprep.subr.bf16.mxu0 0
      %2248 = vmatpush2.bf16.msra.mxu0 %v2050
      %2249 = vmatprep.subr.bf16.mxu0 0
      %2250 = vmatpush2.bf16.msra.mxu0 %v2049
      %2251 = vmatprep.subr.bf16.mxu0 0
      %2252 = vmatpush2.bf16.msra.mxu0 %v2048
      %2253 = vmatprep.subr.bf16.mxu0 0
      %2254 = vmatpush2.bf16.msra.mxu0 %v2047
      %2255 = vmatprep.mubr.bf16.mxu0 %v1775
      %2256 = vmatmul.mubr.bf16.gmra.mxu0 %v1774
      %v2257 = vpop.f32.mrf.mxu0
      %v2258 = vadd.f32 %v2122, %v2257
      %v2259 = vpop.f32.mrf.mxu0
      %v2260 = vpop.f32.mrf.mxu0
      %v2261 = vadd.f32 %v2125, %v2260
      %v2262 = vpop.f32.mrf.mxu0
      %2263 = vmatprep.mubr.bf16.mxu0 %v1779
      %2264 = vmatmul.mubr.bf16.gmra.mxu0 %v1778
      %v2265 = vpop.f32.mrf.mxu0
      %v2266 = vadd.f32 %v2130, %v2265
      %v2267 = vpop.f32.mrf.mxu0
      %v2268 = vpop.f32.mrf.mxu0
      %v2269 = vadd.f32 %v2133, %v2268
      %v2270 = vpop.f32.mrf.mxu0
      %2271 = vmatprep.mubr.bf16.mxu0 %v1783
      %2272 = vmatmul.mubr.bf16.gmra.mxu0 %v1782
      %v2273 = vpop.f32.mrf.mxu0
      %v2274 = vadd.f32 %v2138, %v2273
      %v2275 = vpop.f32.mrf.mxu0
      %v2276 = vpop.f32.mrf.mxu0
      %v2277 = vadd.f32 %v2141, %v2276
      %v2278 = vpop.f32.mrf.mxu0
      %2279 = vmatprep.mubr.bf16.mxu0 %v1787
      %2280 = vmatmul.mubr.bf16.gmra.mxu0 %v1786
      %v2281 = vpop.f32.mrf.mxu0
      %v2282 = vadd.f32 %v2146, %v2281
      %v2283 = vpop.f32.mrf.mxu0
      %v2284 = vpop.f32.mrf.mxu0
      %v2285 = vadd.f32 %v2149, %v2284
      %v2286 = vpop.f32.mrf.mxu0
      %2287 = vmatprep.mubr.bf16.mxu0 %v1791
      %2288 = vmatmul.mubr.bf16.gmra.mxu0 %v1790
      %v2289 = vpop.f32.mrf.mxu0
      %v2290 = vadd.f32 %v2154, %v2289
      %v2291 = vpop.f32.mrf.mxu0
      %v2292 = vpop.f32.mrf.mxu0
      %v2293 = vadd.f32 %v2157, %v2292
      %v2294 = vpop.f32.mrf.mxu0
      %2295 = vmatprep.mubr.bf16.mxu0 %v1795
      %2296 = vmatmul.mubr.bf16.gmra.mxu0 %v1794
      %v2297 = vpop.f32.mrf.mxu0
      %v2298 = vadd.f32 %v2162, %v2297
      %v2299 = vpop.f32.mrf.mxu0
      %v2300 = vpop.f32.mrf.mxu0
      %v2301 = vadd.f32 %v2165, %v2300
      %v2302 = vpop.f32.mrf.mxu0
      %2303 = vmatprep.mubr.bf16.mxu0 %v1799
      %2304 = vmatmul.mubr.bf16.gmra.mxu0 %v1798
      %v2305 = vpop.f32.mrf.mxu0
      %v2306 = vadd.f32 %v2170, %v2305
      %v2307 = vpop.f32.mrf.mxu0
      %v2308 = vpop.f32.mrf.mxu0
      %v2309 = vadd.f32 %v2173, %v2308
      %v2310 = vpop.f32.mrf.mxu0
      %2311 = vmatprep.mubr.bf16.mxu0 %v1803
      %2312 = vmatmul.mubr.bf16.gmra.mxu0 %v1802
      %v2313 = vpop.f32.mrf.mxu0
      %v2314 = vadd.f32 %v2178, %v2313
      %v2315 = vpop.f32.mrf.mxu0
      %v2316 = vpop.f32.mrf.mxu0
      %v2317 = vadd.f32 %v2181, %v2316
      %v2318 = vpop.f32.mrf.mxu0
      %2319 = vmatprep.mubr.bf16.mxu0 %v1807
      %2320 = vmatmul.mubr.bf16.gmra.mxu0 %v1806
      %v2321 = vpop.f32.mrf.mxu0
      %v2322 = vadd.f32 %v2186, %v2321
      %v2323 = vpop.f32.mrf.mxu0
      %v2324 = vpop.f32.mrf.mxu0
      %v2325 = vadd.f32 %v2189, %v2324
      %v2326 = vpop.f32.mrf.mxu0
      %2327 = vmatprep.mubr.bf16.mxu0 %v1811
      %2328 = vmatmul.mubr.bf16.gmra.mxu0 %v1810
      %v2329 = vpop.f32.mrf.mxu0
      %v2330 = vadd.f32 %v2194, %v2329
      %v2331 = vpop.f32.mrf.mxu0
      %v2332 = vpop.f32.mrf.mxu0
      %v2333 = vadd.f32 %v2197, %v2332
      %v2334 = vpop.f32.mrf.mxu0
      %2335 = vmatprep.mubr.bf16.mxu0 %v1815
      %2336 = vmatmul.mubr.bf16.gmra.mxu0 %v1814
      %v2337 = vpop.f32.mrf.mxu0
      %v2338 = vadd.f32 %v2202, %v2337
      %v2339 = vpop.f32.mrf.mxu0
      %v2340 = vpop.f32.mrf.mxu0
      %v2341 = vadd.f32 %v2205, %v2340
      %v2342 = vpop.f32.mrf.mxu0
      %2343 = vmatprep.mubr.bf16.mxu0 %v1819
      %2344 = vmatmul.mubr.bf16.gmra.mxu0 %v1818
      %v2345 = vpop.f32.mrf.mxu0
      %v2346 = vadd.f32 %v2210, %v2345
      %v2347 = vpop.f32.mrf.mxu0
      %v2348 = vpop.f32.mrf.mxu0
      %v2349 = vadd.f32 %v2213, %v2348
      %v2350 = vpop.f32.mrf.mxu0
      %2351 = vmatprep.mubr.bf16.mxu0 %v1823
      %2352 = vmatmul.mubr.bf16.gmra.mxu0 %v1822
      %v2353 = vpop.f32.mrf.mxu0
      %v2354 = vadd.f32 %v2218, %v2353
      %v2355 = vpop.f32.mrf.mxu0
      %v2356 = vpop.f32.mrf.mxu0
      %v2357 = vpop.f32.mrf.mxu0
      %2358 = vdwg.mxu0
      %2359 = vst [vmem:[%s280] sm:$0xff] %v2258
      %2360 = vst [vmem:[%s280 + $0x8] sm:$0xff] %v2261
      %2361 = vst [vmem:[%s280 + $0x10] sm:$0xff] %v2266
      %2362 = vst [vmem:[%s280 + $0x18] sm:$0xff] %v2269
      %2363 = vst [vmem:[%s280 + $0x20] sm:$0xff] %v2274
      %2364 = vst [vmem:[%s280 + $0x28] sm:$0xff] %v2277
      %2365 = vst [vmem:[%s280 + $0x30] sm:$0xff] %v2282
      %2366 = vst [vmem:[%s280 + $0x38] sm:$0xff] %v2285
      %2367 = vst [vmem:[%s280 + $0x40] sm:$0xff] %v2290
      %2368 = vst [vmem:[%s280 + $0x48] sm:$0xff] %v2293
      %2369 = vst [vmem:[%s280 + $0x50] sm:$0xff] %v2298
      %2370 = vst [vmem:[%s280 + $0x58] sm:$0xff] %v2301
      %2371 = vst [vmem:[%s280 + $0x60] sm:$0xff] %v2306
      %2372 = vst [vmem:[%s280 + $0x68] sm:$0xff] %v2309
      %2373 = vst [vmem:[%s280 + $0x70] sm:$0xff] %v2314
      %2374 = vst [vmem:[%s280 + $0x78] sm:$0xff] %v2317
      %2375 = vst [vmem:[%s280 + $0x80] sm:$0xff] %v2322
      %2376 = vst [vmem:[%s280 + $0x88] sm:$0xff] %v2325
      %2377 = vst [vmem:[%s280 + $0x90] sm:$0xff] %v2330
      %2378 = vst [vmem:[%s280 + $0x98] sm:$0xff] %v2333
      %2379 = vst [vmem:[%s280 + $0xa0] sm:$0xff] %v2338
      %2380 = vst [vmem:[%s280 + $0xa8] sm:$0xff] %v2341
      %2381 = vst [vmem:[%s280 + $0xb0] sm:$0xff] %v2346
      %2382 = vst [vmem:[%s280 + $0xb8] sm:$0xff] %v2349
      %2383 = vst [vmem:[%s280 + $0xc0] sm:$0xff] %v2354
      %s2384 = smul.u32 25, %s18
      %p2385 = scmp.lt.s32.totalorder %s2384, 49
      %s2386 = scalar_select %p2385, %s2384, 49
      %s2387 = smul.addr %s2386, 8
      %s2388 = scalar_lea.vmem %s7, %s2387
      // Predicated region
      $region49: #{_mlp_block_impl.1} parent=47 // pred_check
        %p2389 = pneg %p188
      $region50: #{_mlp_block_impl.1} parent=47 // pred_check_branch
        %2391 = sbr.rel (%p2389) target = $region52
      $region51: #{_mlp_block_impl.1} parent=47 // pred_region
        %s2392 = smul.u32 25, %s18
      $region52: #{_mlp_block_impl.1} parent=47 // pred_fallthru
        _
    $region48: #{_mlp_block_impl.1} parent=5 // pred_fallthru
      _
    %p2393 = scmp.le.s32.totalorder 2, %s13
    // Predicated region
    $region53: #{_mlp_block_impl.1} parent=5 // pred_check
      %p2394 = pneg %p2393
    $region54: #{_mlp_block_impl.1} parent=5 // pred_check_branch
      %2396 = sbr.rel (%p2394) target = $region56
    $region55: #{_mlp_block_impl.1} parent=5 // pred_region
      %s2397 = ssub.s32 %s13, 2
      // Predicated region
      $region57: #{_mlp_block_impl.1} parent=55 // pred_check
        %p2398 = pneg %p194
      $region58: #{_mlp_block_impl.1} parent=55 // pred_check_branch
        %2400 = sbr.rel (%p2398) target = $region60
      $region59: #{_mlp_block_impl.1} parent=55 // pred_region
        %s2401 = smul.u32 25, %s19
        %p2402 = scmp.lt.s32.totalorder %s2401, 49
        %s2403 = scalar_select %p2402, %s2401, 49
        %s2404 = smul.addr %s2403, 8
        %s2405 = scalar_lea.vmem %s7, %s2404
      $region60: #{_mlp_block_impl.1} parent=55 // pred_fallthru
        _
    $region56: #{_mlp_block_impl.1} parent=5 // pred_fallthru
      _
  $region6: #{_mlp_block_impl.1} parent=0 // loop_footer
    %s17 = sadd.s32 1, %s13
  $region7: #{_mlp_block_impl.1} parent=0 // loop_footer_branch
    %12 = sbr.rel target = $region3
  $region8: #{_mlp_block_impl.1} parent=0 // loop_exit
    _

</llo_original>
